<compile_context>
chip_gen: v6e
topology: v6e:2x2x1
jax: 0.10.0
libtpu: 0.0.40
codegen_flags: <defaults>
</compile_context>

<pallas_src>
import jax
import jax.numpy as jnp
from jax import lax
from jax.experimental import pallas as pl
from jax.experimental.pallas import tpu as pltpu

# ---------------------------------------------------------------------------
# config (small, consistent with the module's __init__)
# ---------------------------------------------------------------------------
NUM_LOCATIONS = 256
NUM_PROTOTYPES = 8
BASE_DIM = 32
PREFER_DIM = 16
NUM_USERS = 10
NUM_TIMESLOTS = 24
BATCH = 2
SEQ = 8          # length of timeslot sequence per example
LN_EPS = 1e-5    # torch.nn.LayerNorm default

# Parameter-slab row layout (all slice starts are multiples of 8 -> sublane
# aligned, no relayout inside the kernel):
_P_OFF = 0                                   # prototypes        rows   0:8
_WQ_OFF = NUM_PROTOTYPES                     # Wq                rows   8:40
_WK_OFF = _WQ_OFF + BASE_DIM                 # Wk                rows  40:72
_W1_OFF = _WK_OFF + BASE_DIM                 # W1                rows  72:104
_W2_OFF = _W1_OFF + BASE_DIM                 # W2                rows 104:136
_B_OFF = _W2_OFF + BASE_DIM                  # bq,bk,b1,b2,g,b   rows 136:142
_SLAB_ROWS = _B_OFF + 8                      # bias block padded to 8 -> 144


def _default_tile_l():
    """v7x has 2 TensorCores/chip: split the location axis across them.
    Single-TC chips (v5e/v6e) keep one grid step (no redundant weight reads,
    no extra ~0.35us step overhead)."""
    try:
        kind = jax.devices()[0].device_kind.lower()
    except Exception:
        kind = ""
    if "v7" in kind:
        return NUM_LOCATIONS // 2
    return NUM_LOCATIONS


# ---------------------------------------------------------------------------
# Pallas kernel: prototype-attention + FFN + LayerNorm over a tile of locations
# ---------------------------------------------------------------------------
def _proto_fusion_kernel(loc_ref, p_ref, out_ref):
    D = BASE_DIM
    P = NUM_PROTOTYPES

    loc_f32 = loc_ref[...]                                   # [TL, D] f32
    loc = loc_f32.astype(jnp.bfloat16)                       # MXU operand

    proto_f32 = p_ref[_P_OFF:_P_OFF + P, :]                  # [P, D] f32
    proto = proto_f32.astype(jnp.bfloat16)
    wq = p_ref[_WQ_OFF:_WQ_OFF + D, :].astype(jnp.bfloat16)
    wk = p_ref[_WK_OFF:_WK_OFF + D, :].astype(jnp.bfloat16)
    w1 = p_ref[_W1_OFF:_W1_OFF + D, :].astype(jnp.bfloat16)
    w2 = p_ref[_W2_OFF:_W2_OFF + D, :].astype(jnp.bfloat16)
    bq = p_ref[_B_OFF + 0:_B_OFF + 1, :]
    bk = p_ref[_B_OFF + 1:_B_OFF + 2, :]
    b1 = p_ref[_B_OFF + 2:_B_OFF + 3, :]
    b2 = p_ref[_B_OFF + 3:_B_OFF + 4, :]
    gamma = p_ref[_B_OFF + 4:_B_OFF + 5, :]
    beta = p_ref[_B_OFF + 5:_B_OFF + 6, :]

    # k = k_proj_loc(proto_emb)                              [P, D]
    k = jnp.dot(proto, wk, preferred_element_type=jnp.float32) + bk
    k_bf = k.astype(jnp.bfloat16)

    # Fold the q-projection into the scores matmul:
    #   scores = (loc @ Wq + bq) @ k.T = loc @ (Wq @ k.T) + (bq @ k.T)
    # dot_general contracts k's feature axis directly (no k.T relayout).
    dn = (((1,), (1,)), ((), ()))
    m = lax.dot_general(wq, k_bf, dn, preferred_element_type=jnp.float32)   # [D, P]
    c = lax.dot_general(bq.astype(jnp.bfloat16), k_bf, dn,
                        preferred_element_type=jnp.float32)                 # [1, P]

    scores = jnp.dot(loc, m.astype(jnp.bfloat16),
                     preferred_element_type=jnp.float32) + c                # [TL, P]
    scores = scores - jnp.max(scores, axis=-1, keepdims=True)
    e = jnp.exp(scores)
    denom = jnp.sum(e, axis=-1, keepdims=True)
    weights = e * pl.reciprocal(denom, approx=True)                         # EUP vrcp

    # loc_proto_emb = weights @ proto_emb                    [TL, D]
    loc_proto = jnp.dot(weights.astype(jnp.bfloat16), proto,
                        preferred_element_type=jnp.float32)

    # FFN(loc_proto + loc) = Linear -> ReLU -> Linear
    fusion = loc_proto + loc_f32
    h = jnp.dot(fusion.astype(jnp.bfloat16), w1,
                preferred_element_type=jnp.float32) + b1
    h = jnp.maximum(h, 0.0)
    ffn_out = jnp.dot(h.astype(jnp.bfloat16), w2,
                      preferred_element_type=jnp.float32) + b2

    # LayerNorm(ffn_out + loc_proto) over the feature axis (f32 math).
    x = ffn_out + loc_proto
    mean = jnp.mean(x, axis=-1, keepdims=True)
    var = jnp.mean((x - mean) * (x - mean), axis=-1, keepdims=True)
    enh = (x - mean) * lax.rsqrt(var + LN_EPS) * gamma + beta

    # Lane-packed output [TL, 2*D]: lanes [:D]=loc_proto, [D:]=enhanced.
    out_ref[...] = jnp.concatenate([loc_proto, enh], axis=-1).astype(out_ref.dtype)


def proto_fusion(loc_emb_all, param_slab, *, tile_l=None):
    L, D = loc_emb_all.shape
    P = NUM_PROTOTYPES
    if tile_l is None:
        tile_l = _default_tile_l()
    tile_l = min(tile_l, L)
    assert L % tile_l == 0
    grid = (L // tile_l,)

    flops = (2 * P * D * D            # k projection
             + 2 * D * D * P          # M = Wq @ k.T
             + 2 * D * P              # c = bq @ k.T
             + 2 * L * D * P          # scores = loc @ M
             + 2 * L * P * D          # weights @ proto
             + 2 * 2 * L * D * D      # FFN (two DxD layers)
             + 12 * L * D)            # bias / relu / residual / layernorm
    cost = pl.CostEstimate(
        flops=flops,
        transcendentals=L * P + 2 * L,   # exp + rsqrt + reciprocal
        bytes_accessed=4 * (L * D + _SLAB_ROWS * D + L * 2 * D),
    )

    packed = pl.pallas_call(
        _proto_fusion_kernel,
        out_shape=jax.ShapeDtypeStruct((L, 2 * D), jnp.float32),
        grid_spec=pltpu.PrefetchScalarGridSpec(
            num_scalar_prefetch=0,
            grid=grid,
            in_specs=[
                pl.BlockSpec((tile_l, D), lambda i: (i, 0)),       # loc tile
                pl.BlockSpec((_SLAB_ROWS, D), lambda i: (0, 0)),   # param slab
            ],
            out_specs=pl.BlockSpec((tile_l, 2 * D), lambda i: (i, 0)),
        ),
        compiler_params=pltpu.CompilerParams(
            dimension_semantics=("parallel",)),
        cost_estimate=cost,
    )(loc_emb_all, param_slab)

    return packed[:, :D], packed[:, D:]


# ---------------------------------------------------------------------------
# parameter construction (deterministic, in-script)
# ---------------------------------------------------------------------------
def init_params(key):
    ks = jax.random.split(key, 11)
    p = {}
    es = 0.5
    p["user_embedding"] = es * jax.random.normal(ks[0], (NUM_USERS, BASE_DIM), jnp.float32)
    p["prefer_embedding"] = es * jax.random.normal(ks[1], (NUM_USERS, PREFER_DIM), jnp.float32)
    p["location_embedding"] = es * jax.random.normal(ks[2], (NUM_LOCATIONS, BASE_DIM), jnp.float32)
    p["timeslot_embedding"] = es * jax.random.normal(ks[3], (NUM_TIMESLOTS, BASE_DIM), jnp.float32)
    p["prototypes_embedding"] = es * jax.random.normal(ks[4], (NUM_PROTOTYPES, BASE_DIM), jnp.float32)
    # Linear layers stored PRE-TRANSPOSED as [in, out] so the kernel does x @ W.
    ws = 1.0 / jnp.sqrt(BASE_DIM)
    p["wq"] = ws * jax.random.normal(ks[5], (BASE_DIM, BASE_DIM), jnp.float32)
    p["bq"] = 0.01 * jax.random.normal(ks[6], (1, BASE_DIM), jnp.float32)
    p["wk"] = ws * jax.random.normal(ks[7], (BASE_DIM, BASE_DIM), jnp.float32)
    p["bk"] = 0.01 * jax.random.normal(ks[8], (1, BASE_DIM), jnp.float32)
    p["w1"] = ws * jax.random.normal(ks[9], (BASE_DIM, BASE_DIM), jnp.float32)
    p["b1"] = jnp.zeros((1, BASE_DIM), jnp.float32)
    p["w2"] = ws * jax.random.normal(ks[10], (BASE_DIM, BASE_DIM), jnp.float32)
    p["b2"] = jnp.zeros((1, BASE_DIM), jnp.float32)
    p["ln_gamma"] = jnp.ones((1, BASE_DIM), jnp.float32)   # torch LayerNorm default
    p["ln_beta"] = jnp.zeros((1, BASE_DIM), jnp.float32)
    # ONE consolidated parameter slab (single input DMA for the kernel):
    #   rows  0:8   prototypes
    #   rows  8:136 Wq | Wk | W1 | W2
    #   rows 136:144 bq,bk,b1,b2,gamma,beta + 2 zero pad rows (8-row aligned)
    bias_block = jnp.concatenate(
        [p["bq"], p["bk"], p["b1"], p["b2"], p["ln_gamma"], p["ln_beta"],
         jnp.zeros((2, BASE_DIM), jnp.float32)], axis=0)
    p["param_slab"] = jnp.concatenate(
        [p["prototypes_embedding"], p["wq"], p["wk"], p["w1"], p["w2"], bias_block],
        axis=0)
    assert p["param_slab"].shape == (_SLAB_ROWS, BASE_DIM)
    return p


# ---------------------------------------------------------------------------
# forward pass (mirrors MyEmbedding.forward)
# ---------------------------------------------------------------------------
def my_embedding_forward(params, user_ids, timeslot_ids):
    # embedding gathers: plain-JAX glue (no matmul/reduction hot path here)
    loc_emb_all = params["location_embedding"]                               # [L, D]
    user_emb = jnp.take(params["user_embedding"], user_ids, axis=0)          # [B, D]
    time_emb = jnp.take(params["timeslot_embedding"], timeslot_ids, axis=0)  # [B, T, D]
    prefer_emb = jnp.take(params["prefer_embedding"], user_ids, axis=0)      # [B, Dp]

    # user_emb.unsqueeze(1).expand_as(time_emb)
    user_emb = jnp.broadcast_to(user_emb[:, None, :], time_emb.shape)        # [B, T, D]

    # prototype attention + FFN + LayerNorm (single Pallas kernel call)
    loc_proto_emb, loc_proto_emb_enhanced = proto_fusion(
        loc_emb_all, params["param_slab"])

    return (loc_emb_all, time_emb, user_emb, loc_proto_emb_enhanced,
            prefer_emb, loc_proto_emb)


# pure-JAX (f32) reference for the prototype path (sanity check)
def _proto_fusion_ref(p):
    loc = p["location_embedding"]
    proto = p["prototypes_embedding"]
    q = loc @ p["wq"] + p["bq"]
    k = proto @ p["wk"] + p["bk"]
    w = jax.nn.softmax(q @ k.T, axis=-1)
    loc_proto = w @ proto
    fusion = loc_proto + loc
    h = jnp.maximum(fusion @ p["w1"] + p["b1"], 0.0)
    ffn_out = h @ p["w2"] + p["b2"]
    x = ffn_out + loc_proto
    mean = jnp.mean(x, axis=-1, keepdims=True)
    var = jnp.mean((x - mean) ** 2, axis=-1, keepdims=True)
    enh = (x - mean) / jnp.sqrt(var + LN_EPS) * p["ln_gamma"] + p["ln_beta"]
    return loc_proto, enh


if __name__ == "__main__":
    key = jax.random.PRNGKey(0)
    pkey, ukey, tkey = jax.random.split(key, 3)

    params = init_params(pkey)
    user_ids = jax.random.randint(ukey, (BATCH,), 0, NUM_USERS)
    timeslot_ids = jax.random.randint(tkey, (BATCH, SEQ), 0, NUM_TIMESLOTS)

    outs = my_embedding_forward(params, user_ids, timeslot_ids)
    outs = jax.block_until_ready(outs)

    loc_emb_all, time_emb, user_emb, enh, prefer_emb, loc_proto = outs
    assert loc_emb_all.shape == (NUM_LOCATIONS, BASE_DIM)
    assert time_emb.shape == (BATCH, SEQ, BASE_DIM)
    assert user_emb.shape == (BATCH, SEQ, BASE_DIM)
    assert enh.shape == (NUM_LOCATIONS, BASE_DIM)
    assert prefer_emb.shape == (BATCH, PREFER_DIM)
    assert loc_proto.shape == (NUM_LOCATIONS, BASE_DIM)

    # bf16 MXU operands (f32 accumulate) vs. f32 reference -> 2e-2 tolerance.
    ref_proto, ref_enh = _proto_fusion_ref(params)
    assert jnp.allclose(loc_proto, ref_proto, rtol=2e-2, atol=2e-2), (
        float(jnp.max(jnp.abs(loc_proto - ref_proto))))
    assert jnp.allclose(enh, ref_enh, rtol=2e-2, atol=2e-2), (
        float(jnp.max(jnp.abs(enh - ref_enh))))

    print("KERNEL_OK")
</pallas_src>

<mosaic_0001>
module attributes {stable_mosaic.version = 11 : i64} {
  func.func @_proto_fusion_kernel(%arg0: i32, %arg1: memref<256x32xf32, #tpu.memory_space<vmem>>, %arg2: memref<144x32xf32, #tpu.memory_space<vmem>>, %arg3: memref<256x64xf32, #tpu.memory_space<vmem>>) attributes {dimension_semantics = [#tpu.dimension_semantics<parallel>], iteration_bounds = array<i64: 1>, scalar_prefetch = 0 : i64, scratch_operands = 0 : i64, tpu.core_type = #tpu.core_type<tc>, window_params = [{transform_indices = @transform_0, window_bounds = array<i64: 256, 32>}, {pipeline_mode = #tpu.pipeline_mode<synchronous>, transform_indices = @transform_1, window_bounds = array<i64: 144, 32>}, {transform_indices = @transform_2, window_bounds = array<i64: 256, 64>}]} {
    %c0 = arith.constant 0 : index
    %c0_0 = arith.constant 0 : index
    %0 = vector.load %arg1[%c0, %c0_0] : memref<256x32xf32, #tpu.memory_space<vmem>>, vector<256x32xf32>
    %1 = arith.truncf %0 : vector<256x32xf32> to vector<256x32xbf16>
    %c0_1 = arith.constant 0 : index
    %c0_2 = arith.constant 0 : index
    %2 = vector.load %arg2[%c0_1, %c0_2] : memref<144x32xf32, #tpu.memory_space<vmem>>, vector<8x32xf32>
    %3 = arith.truncf %2 : vector<8x32xf32> to vector<8x32xbf16>
    %c8 = arith.constant 8 : index
    %c0_3 = arith.constant 0 : index
    %4 = vector.load %arg2[%c8, %c0_3] : memref<144x32xf32, #tpu.memory_space<vmem>>, vector<32x32xf32>
    %5 = arith.truncf %4 : vector<32x32xf32> to vector<32x32xbf16>
    %c40 = arith.constant 40 : index
    %c0_4 = arith.constant 0 : index
    %6 = vector.load %arg2[%c40, %c0_4] : memref<144x32xf32, #tpu.memory_space<vmem>>, vector<32x32xf32>
    %7 = arith.truncf %6 : vector<32x32xf32> to vector<32x32xbf16>
    %c72 = arith.constant 72 : index
    %c0_5 = arith.constant 0 : index
    %8 = vector.load %arg2[%c72, %c0_5] : memref<144x32xf32, #tpu.memory_space<vmem>>, vector<32x32xf32>
    %9 = arith.truncf %8 : vector<32x32xf32> to vector<32x32xbf16>
    %c104 = arith.constant 104 : index
    %c0_6 = arith.constant 0 : index
    %10 = vector.load %arg2[%c104, %c0_6] : memref<144x32xf32, #tpu.memory_space<vmem>>, vector<32x32xf32>
    %11 = arith.truncf %10 : vector<32x32xf32> to vector<32x32xbf16>
    %c136 = arith.constant 136 : index
    %c0_7 = arith.constant 0 : index
    %12 = vector.load %arg2[%c136, %c0_7] : memref<144x32xf32, #tpu.memory_space<vmem>>, vector<1x32xf32>
    %c137 = arith.constant 137 : index
    %c0_8 = arith.constant 0 : index
    %13 = vector.load %arg2[%c137, %c0_8] : memref<144x32xf32, #tpu.memory_space<vmem>>, vector<1x32xf32>
    %c138 = arith.constant 138 : index
    %c0_9 = arith.constant 0 : index
    %14 = vector.load %arg2[%c138, %c0_9] : memref<144x32xf32, #tpu.memory_space<vmem>>, vector<1x32xf32>
    %c139 = arith.constant 139 : index
    %c0_10 = arith.constant 0 : index
    %15 = vector.load %arg2[%c139, %c0_10] : memref<144x32xf32, #tpu.memory_space<vmem>>, vector<1x32xf32>
    %c140 = arith.constant 140 : index
    %c0_11 = arith.constant 0 : index
    %16 = vector.load %arg2[%c140, %c0_11] : memref<144x32xf32, #tpu.memory_space<vmem>>, vector<1x32xf32>
    %c141 = arith.constant 141 : index
    %c0_12 = arith.constant 0 : index
    %17 = vector.load %arg2[%c141, %c0_12] : memref<144x32xf32, #tpu.memory_space<vmem>>, vector<1x32xf32>
    %cst = arith.constant dense<0.000000e+00> : vector<8x32xf32>
    %18 = tpu.matmul %3, %7, %cst {dimension_numbers = #tpu.dot_dimension_numbers<[1], [0], [0], [1], [0, 0, 1, 1], [], []>} : vector<8x32xbf16>, vector<32x32xbf16>, vector<8x32xf32> -> vector<8x32xf32>
    %19 = vector.broadcast %13 : vector<1x32xf32> to vector<8x32xf32>
    %20 = arith.addf %18, %19 : vector<8x32xf32>
    %21 = arith.truncf %20 : vector<8x32xf32> to vector<8x32xbf16>
    %cst_13 = arith.constant dense<0.000000e+00> : vector<32x8xf32>
    %22 = tpu.matmul %5, %21, %cst_13 {dimension_numbers = #tpu.dot_dimension_numbers<[1], [1], [0], [0], [0, 0, 1, 0], [], []>} : vector<32x32xbf16>, vector<8x32xbf16>, vector<32x8xf32> -> vector<32x8xf32>
    %23 = arith.truncf %12 : vector<1x32xf32> to vector<1x32xbf16>
    %cst_14 = arith.constant dense<0.000000e+00> : vector<1x8xf32>
    %24 = tpu.matmul %23, %21, %cst_14 {dimension_numbers = #tpu.dot_dimension_numbers<[1], [1], [0], [0], [0, 0, 1, 0], [], []>} : vector<1x32xbf16>, vector<8x32xbf16>, vector<1x8xf32> -> vector<1x8xf32>
    %25 = arith.truncf %22 : vector<32x8xf32> to vector<32x8xbf16>
    %cst_15 = arith.constant dense<0.000000e+00> : vector<256x8xf32>
    %26 = tpu.matmul %1, %25, %cst_15 {dimension_numbers = #tpu.dot_dimension_numbers<[1], [0], [0], [1], [0, 0, 1, 1], [], []>} : vector<256x32xbf16>, vector<32x8xbf16>, vector<256x8xf32> -> vector<256x8xf32>
    %27 = vector.broadcast %24 : vector<1x8xf32> to vector<256x8xf32>
    %28 = arith.addf %26, %27 : vector<256x8xf32>
    %cst_16 = arith.constant dense<0xFF800000> : vector<256xf32>
    %29 = vector.multi_reduction <maximumf>, %28, %cst_16 [1] : vector<256x8xf32> to vector<256xf32>
    %30 = vector.shape_cast %29 : vector<256xf32> to vector<256x1xf32>
    %31 = vector.broadcast %30 : vector<256x1xf32> to vector<256x8xf32>
    %32 = arith.subf %28, %31 : vector<256x8xf32>
    %33 = math.exp %32 : vector<256x8xf32>
    %cst_17 = arith.constant dense<0.000000e+00> : vector<256xf32>
    %34 = vector.multi_reduction <add>, %33, %cst_17 [1] : vector<256x8xf32> to vector<256xf32>
    %35 = vector.shape_cast %34 : vector<256xf32> to vector<256x1xf32>
    %36 = tpu.reciprocal %35 {approx = true} : vector<256x1xf32> -> vector<256x1xf32>
    %37 = vector.broadcast %36 : vector<256x1xf32> to vector<256x8xf32>
    %38 = arith.mulf %33, %37 : vector<256x8xf32>
    %39 = arith.truncf %38 : vector<256x8xf32> to vector<256x8xbf16>
    %cst_18 = arith.constant dense<0.000000e+00> : vector<256x32xf32>
    %40 = tpu.matmul %39, %3, %cst_18 {dimension_numbers = #tpu.dot_dimension_numbers<[1], [0], [0], [1], [0, 0, 1, 1], [], []>} : vector<256x8xbf16>, vector<8x32xbf16>, vector<256x32xf32> -> vector<256x32xf32>
    %41 = arith.addf %40, %0 : vector<256x32xf32>
    %42 = arith.truncf %41 : vector<256x32xf32> to vector<256x32xbf16>
    %cst_19 = arith.constant dense<0.000000e+00> : vector<256x32xf32>
    %43 = tpu.matmul %42, %9, %cst_19 {dimension_numbers = #tpu.dot_dimension_numbers<[1], [0], [0], [1], [0, 0, 1, 1], [], []>} : vector<256x32xbf16>, vector<32x32xbf16>, vector<256x32xf32> -> vector<256x32xf32>
    %44 = vector.broadcast %14 : vector<1x32xf32> to vector<256x32xf32>
    %45 = arith.addf %43, %44 : vector<256x32xf32>
    %cst_20 = arith.constant 0.000000e+00 : f32
    %46 = vector.broadcast %cst_20 : f32 to vector<256x32xf32>
    %47 = arith.maximumf %45, %46 : vector<256x32xf32>
    %48 = arith.truncf %47 : vector<256x32xf32> to vector<256x32xbf16>
    %cst_21 = arith.constant dense<0.000000e+00> : vector<256x32xf32>
    %49 = tpu.matmul %48, %11, %cst_21 {dimension_numbers = #tpu.dot_dimension_numbers<[1], [0], [0], [1], [0, 0, 1, 1], [], []>} : vector<256x32xbf16>, vector<32x32xbf16>, vector<256x32xf32> -> vector<256x32xf32>
    %50 = vector.broadcast %15 : vector<1x32xf32> to vector<256x32xf32>
    %51 = arith.addf %49, %50 : vector<256x32xf32>
    %52 = arith.addf %51, %40 : vector<256x32xf32>
    %cst_22 = arith.constant dense<0.000000e+00> : vector<256xf32>
    %53 = vector.multi_reduction <add>, %52, %cst_22 [1] : vector<256x32xf32> to vector<256xf32>
    %54 = vector.shape_cast %53 : vector<256xf32> to vector<256x1xf32>
    %cst_23 = arith.constant 3.200000e+01 : f32
    %55 = vector.broadcast %cst_23 : f32 to vector<256x1xf32>
    %56 = arith.divf %54, %55 : vector<256x1xf32>
    %57 = vector.broadcast %56 : vector<256x1xf32> to vector<256x32xf32>
    %58 = arith.subf %52, %57 : vector<256x32xf32>
    %59 = vector.broadcast %56 : vector<256x1xf32> to vector<256x32xf32>
    %60 = arith.subf %52, %59 : vector<256x32xf32>
    %61 = arith.mulf %58, %60 : vector<256x32xf32>
    %cst_24 = arith.constant dense<0.000000e+00> : vector<256xf32>
    %62 = vector.multi_reduction <add>, %61, %cst_24 [1] : vector<256x32xf32> to vector<256xf32>
    %63 = vector.shape_cast %62 : vector<256xf32> to vector<256x1xf32>
    %cst_25 = arith.constant 3.200000e+01 : f32
    %64 = vector.broadcast %cst_25 : f32 to vector<256x1xf32>
    %65 = arith.divf %63, %64 : vector<256x1xf32>
    %66 = vector.broadcast %56 : vector<256x1xf32> to vector<256x32xf32>
    %67 = arith.subf %52, %66 : vector<256x32xf32>
    %cst_26 = arith.constant 9.99999974E-6 : f32
    %68 = vector.broadcast %cst_26 : f32 to vector<256x1xf32>
    %69 = arith.addf %65, %68 : vector<256x1xf32>
    %70 = math.rsqrt %69 : vector<256x1xf32>
    %71 = vector.broadcast %70 : vector<256x1xf32> to vector<256x32xf32>
    %72 = arith.mulf %67, %71 : vector<256x32xf32>
    %73 = vector.broadcast %16 : vector<1x32xf32> to vector<256x32xf32>
    %74 = arith.mulf %72, %73 : vector<256x32xf32>
    %75 = vector.broadcast %17 : vector<1x32xf32> to vector<256x32xf32>
    %76 = arith.addf %74, %75 : vector<256x32xf32>
    %77 = tpu.concatenate %40, %76 in 1 : vector<256x32xf32>, vector<256x32xf32> -> vector<256x64xf32>
    %c0_27 = arith.constant 0 : index
    %c0_28 = arith.constant 0 : index
    %78 = vector.load %arg3[%c0_27, %c0_28] : memref<256x64xf32, #tpu.memory_space<vmem>>, vector<256x64xf32>
    tpu.vector_store %arg3[%c0_27, %c0_28], %77 {strides = array<i32>} : memref<256x64xf32, #tpu.memory_space<vmem>>, vector<256x64xf32>,
    return
  }
  func.func @transform_0(%arg0: i32) -> (i32, i32) {
    %c0_i32 = arith.constant 0 : i32
    %c0_i32_0 = arith.constant 0 : i32
    return %arg0, %c0_i32 : i32, i32
  }
  func.func @transform_1(%arg0: i32) -> (i32, i32) {
    %c0_i32 = arith.constant 0 : i32
    %c0_i32_0 = arith.constant 0 : i32
    %c0_i32_1 = arith.constant 0 : i32
    return %c0_i32, %c0_i32_0 : i32, i32
  }
  func.func @transform_2(%arg0: i32) -> (i32, i32) {
    %c0_i32 = arith.constant 0 : i32
    %c0_i32_0 = arith.constant 0 : i32
    return %arg0, %c0_i32 : i32, i32
  }
}

</mosaic_0001>

<llo_original>
// kernel: tpu_custom_call.1
$region0: #{tpu_custom_call.1}
  #allocation0 [shape = 'u32[]', space=smem, size = 0x4, offset = 0x4, fixed_abs, tag = 'smem constant byte address 0x4 - core index']
  #allocation1 [shape = 'u32[144,128]{1,0:T(1,128)}', space=vmem, size = 0x12000, scoped, tag = 'internal scratch']
  %s0 = inlined_call_operand.vmem [shape: f32[256,32], index: 0, kind: input, shape index: {}]
  %s1 = inlined_call_operand.vmem [shape: f32[144,32], index: 1, kind: input, shape index: {}]
  %s2 = inlined_call_operand.vmem [shape: f32[256,64], index: 2, kind: output, shape index: {}]
  %s3 = sld [smem:[#allocation0]]
  $region18: #{tpu_custom_call.1} parent=0
    _
  %s5 = ssub.s32 1, %s3
  %s6 = scalar_select 0, %s5, %s3
  // Predicated region
  $region2: #{tpu_custom_call.1} parent=0 // pred_check
    _
  $region3: #{tpu_custom_call.1} parent=0 // pred_check_branch
    %8 = sbr.rel (0) target = $region5
  $region4: #{tpu_custom_call.1} parent=0 // pred_region
    _
  $region5: #{tpu_custom_call.1} parent=0 // pred_fallthru
    _
  // Predicated region
  $region6: #{tpu_custom_call.1} parent=0 // pred_check
    _
  $region7: #{tpu_custom_call.1} parent=0 // pred_check_branch
    %10 = sbr.rel (0) target = $region9
  $region8: #{tpu_custom_call.1} parent=0 // pred_region
    _
  $region9: #{tpu_custom_call.1} parent=0 // pred_fallthru
    _
  %v12 = vld [vmem:[%s0] sm:$0xff]
  %v13 = vld [vmem:[%s0 + $0x8] sm:$0xff]
  %v14 = vld [vmem:[%s0 + $0x10] sm:$0xff]
  %v15 = vld [vmem:[%s0 + $0x18] sm:$0xff]
  %v16 = vld [vmem:[%s0 + $0x20] sm:$0xff]
  %v17 = vld [vmem:[%s0 + $0x28] sm:$0xff]
  %v18 = vld [vmem:[%s0 + $0x30] sm:$0xff]
  %v19 = vld [vmem:[%s0 + $0x38] sm:$0xff]
  %v20 = vld [vmem:[%s0 + $0x40] sm:$0xff]
  %v21 = vld [vmem:[%s0 + $0x48] sm:$0xff]
  %v22 = vld [vmem:[%s0 + $0x50] sm:$0xff]
  %v23 = vld [vmem:[%s0 + $0x58] sm:$0xff]
  %v24 = vld [vmem:[%s0 + $0x60] sm:$0xff]
  %v25 = vld [vmem:[%s0 + $0x68] sm:$0xff]
  %v26 = vld [vmem:[%s0 + $0x70] sm:$0xff]
  %v27 = vld [vmem:[%s0 + $0x78] sm:$0xff]
  %v28 = vld [vmem:[%s0 + $0x80] sm:$0xff]
  %v29 = vld [vmem:[%s0 + $0x88] sm:$0xff]
  %v30 = vld [vmem:[%s0 + $0x90] sm:$0xff]
  %v31 = vld [vmem:[%s0 + $0x98] sm:$0xff]
  %v32 = vld [vmem:[%s0 + $0xa0] sm:$0xff]
  %v33 = vld [vmem:[%s0 + $0xa8] sm:$0xff]
  %v34 = vld [vmem:[%s0 + $0xb0] sm:$0xff]
  %v35 = vld [vmem:[%s0 + $0xb8] sm:$0xff]
  %v36 = vld [vmem:[%s0 + $0xc0] sm:$0xff]
  %v37 = vld [vmem:[%s0 + $0xc8] sm:$0xff]
  %v38 = vld [vmem:[%s0 + $0xd0] sm:$0xff]
  %v39 = vld [vmem:[%s0 + $0xd8] sm:$0xff]
  %v40 = vld [vmem:[%s0 + $0xe0] sm:$0xff]
  %v41 = vld [vmem:[%s0 + $0xe8] sm:$0xff]
  %v42 = vld [vmem:[%s0 + $0xf0] sm:$0xff]
  %v43 = vld [vmem:[%s0 + $0xf8] sm:$0xff]
  %v44 = vpack.c.bf16 %v13, %v12
  %v45 = vpack.c.bf16 %v15, %v14
  %v46 = vpack.c.bf16 %v17, %v16
  %v47 = vpack.c.bf16 %v19, %v18
  %v48 = vpack.c.bf16 %v21, %v20
  %v49 = vpack.c.bf16 %v23, %v22
  %v50 = vpack.c.bf16 %v25, %v24
  %v51 = vpack.c.bf16 %v27, %v26
  %v52 = vpack.c.bf16 %v29, %v28
  %v53 = vpack.c.bf16 %v31, %v30
  %v54 = vpack.c.bf16 %v33, %v32
  %v55 = vpack.c.bf16 %v35, %v34
  %v56 = vpack.c.bf16 %v37, %v36
  %v57 = vpack.c.bf16 %v39, %v38
  %v58 = vpack.c.bf16 %v41, %v40
  %v59 = vpack.c.bf16 %v43, %v42
  %v60 = vld [vmem:[%s1] sm:$0xff]
  %v61 = vpack.c.bf16 %v60, %v60
  %v62 = vld [vmem:[%s1 + $0x8] sm:$0xff]
  %v63 = vld [vmem:[%s1 + $0x10] sm:$0xff]
  %v64 = vld [vmem:[%s1 + $0x18] sm:$0xff]
  %v65 = vld [vmem:[%s1 + $0x20] sm:$0xff]
  %v66 = vpack.c.bf16 %v63, %v62
  %v67 = vpack.c.bf16 %v65, %v64
  %v68 = vld [vmem:[%s1 + $0x28] sm:$0xff]
  %v69 = vld [vmem:[%s1 + $0x30] sm:$0xff]
  %v70 = vld [vmem:[%s1 + $0x38] sm:$0xff]
  %v71 = vld [vmem:[%s1 + $0x40] sm:$0xff]
  %v72 = vpack.c.bf16 %v69, %v68
  %v73 = vpack.c.bf16 %v71, %v70
  %v74 = vld [vmem:[%s1 + $0x48] sm:$0xff]
  %v75 = vld [vmem:[%s1 + $0x50] sm:$0xff]
  %v76 = vld [vmem:[%s1 + $0x58] sm:$0xff]
  %v77 = vld [vmem:[%s1 + $0x60] sm:$0xff]
  %v78 = vpack.c.bf16 %v75, %v74
  %v79 = vpack.c.bf16 %v77, %v76
  %v80 = vld [vmem:[%s1 + $0x68] sm:$0xff]
  %v81 = vld [vmem:[%s1 + $0x70] sm:$0xff]
  %v82 = vld [vmem:[%s1 + $0x78] sm:$0xff]
  %v83 = vld [vmem:[%s1 + $0x80] sm:$0xff]
  %v84 = vpack.c.bf16 %v81, %v80
  %v85 = vpack.c.bf16 %v83, %v82
  %v86 = vld [vmem:[%s1 + $0x88] sm:$0x1]
  %v87 = vld [vmem:[%s1 + $0x89] sm:$0x1]
  %v88 = vld [vmem:[%s1 + $0x8a] sm:$0x1]
  %v89 = vld [vmem:[%s1 + $0x8b] sm:$0x1]
  %v90 = vld [vmem:[%s1 + $0x8c] sm:$0x1]
  %v91 = vld [vmem:[%s1 + $0x8d] sm:$0x1]
  %v92 = vlaneseq
  %v93 = vshrl.u32 %v92, 7
  %v94 = vsub.s32 0, %v93
  %v95 = vrot.slane %v87, %v94
  %vm96 = vcmask 261120
  %v98 = vsel %vm96, %v61, 0
  %100 = vmatprep.subr.bf16.mxu0 0
  %101 = vmatpush1.bf16.msra.mxu0 0
  %102 = vmatprep.subr.bf16.mxu0 0
  %103 = vmatpush1.bf16.msra.mxu0 0
  %104 = vmatprep.subr.bf16.mxu0 0
  %105 = vmatpush1.bf16.msra.mxu0 0
  %106 = vmatprep.subr.bf16.mxu0 0
  %107 = vmatpush1.bf16.msra.mxu0 0
  %108 = vmatprep.subr.bf16.mxu0 0
  %109 = vmatpush1.bf16.msra.mxu0 0
  %110 = vmatprep.subr.bf16.mxu0 0
  %111 = vmatpush1.bf16.msra.mxu0 0
  %112 = vmatprep.subr.bf16.mxu0 0
  %113 = vmatpush1.bf16.msra.mxu0 %v73
  %114 = vmatprep.subr.bf16.mxu0 0
  %115 = vmatpush1.bf16.msra.mxu0 %v72
  %116 = vmatprep.subr.bf16.mxu0 0
  %117 = vmatpush2.bf16.msra.mxu0 0
  %118 = vmatprep.subr.bf16.mxu0 0
  %119 = vmatpush2.bf16.msra.mxu0 0
  %120 = vmatprep.subr.bf16.mxu0 0
  %121 = vmatpush2.bf16.msra.mxu0 0
  %122 = vmatprep.subr.bf16.mxu0 0
  %123 = vmatpush2.bf16.msra.mxu0 0
  %124 = vmatprep.subr.bf16.mxu0 0
  %125 = vmatpush2.bf16.msra.mxu0 0
  %126 = vmatprep.subr.bf16.mxu0 0
  %127 = vmatpush2.bf16.msra.mxu0 0
  %128 = vmatprep.subr.bf16.mxu0 0
  %129 = vmatpush2.bf16.msra.mxu0 0
  %130 = vmatprep.subr.bf16.mxu0 0
  %131 = vmatpush2.bf16.msra.mxu0 0
  %132 = vmatprep.mubr.bf16.mxu0 0
  %133 = vmatmul.mubr.bf16.gmra.mxu0 %v98
  %v134 = vpop.f32.mrf.mxu0
  %v135 = vadd.f32 %v95, %v134
  %v136 = vpop.f32.mrf.mxu0
  %v137 = vpop.f32.mrf.mxu0
  %v138 = vpop.f32.mrf.mxu0
  %139 = vdwg.mxu0
  %v140 = vpack.c.bf16 %v135, %v135
  %v142 = vsel %vm96, %v66, 0
  %v145 = vsel %vm96, %v67, 0
  %v148 = vsel %vm96, %v140, 0
  %150 = vmatprep.subr.bf16.mxu0 0
  %151 = vmatpush1.bf16.xpose.msra.mxu0 0
  %152 = vmatprep.subr.bf16.mxu0 0
  %153 = vmatpush1.bf16.xpose.msra.mxu0 0
  %154 = vmatprep.subr.bf16.mxu0 0
  %155 = vmatpush1.bf16.xpose.msra.mxu0 0
  %156 = vmatprep.subr.bf16.mxu0 0
  %157 = vmatpush1.bf16.xpose.msra.mxu0 0
  %158 = vmatprep.subr.bf16.mxu0 0
  %159 = vmatpush1.bf16.xpose.msra.mxu0 0
  %160 = vmatprep.subr.bf16.mxu0 0
  %161 = vmatpush1.bf16.xpose.msra.mxu0 0
  %162 = vmatprep.subr.bf16.mxu0 0
  %163 = vmatpush1.bf16.xpose.msra.mxu0 0
  %164 = vmatprep.subr.bf16.mxu0 0
  %165 = vmatpush1.bf16.xpose.msra.mxu0 %v148
  %166 = vmatprep.subr.bf16.mxu0 0
  %167 = vmatpush2.bf16.xpose.msra.mxu0 0
  %168 = vmatprep.subr.bf16.mxu0 0
  %169 = vmatpush2.bf16.xpose.msra.mxu0 0
  %170 = vmatprep.subr.bf16.mxu0 0
  %171 = vmatpush2.bf16.xpose.msra.mxu0 0
  %172 = vmatprep.subr.bf16.mxu0 0
  %173 = vmatpush2.bf16.xpose.msra.mxu0 0
  %174 = vmatprep.subr.bf16.mxu0 0
  %175 = vmatpush2.bf16.xpose.msra.mxu0 0
  %176 = vmatprep.subr.bf16.mxu0 0
  %177 = vmatpush2.bf16.xpose.msra.mxu0 0
  %178 = vmatprep.subr.bf16.mxu0 0
  %179 = vmatpush2.bf16.xpose.msra.mxu0 0
  %180 = vmatprep.subr.bf16.mxu0 0
  %181 = vmatpush2.bf16.xpose.msra.mxu0 0
  %182 = vmatprep.mubr.bf16.mxu0 0
  %183 = vmatmul.mubr.bf16.gmra.mxu0 %v142
  %v184 = vpop.f32.mrf.mxu0
  %v185 = vadd.f32 0.0, %v184
  %v186 = vpop.f32.mrf.mxu0
  %v187 = vpop.f32.mrf.mxu0
  %v188 = vadd.f32 0.0, %v187
  %v189 = vpop.f32.mrf.mxu0
  %190 = vmatprep.mubr.bf16.mxu0 0
  %191 = vmatmul.mubr.bf16.gmra.mxu0 %v145
  %v192 = vpop.f32.mrf.mxu0
  %v193 = vadd.f32 0.0, %v192
  %v194 = vpop.f32.mrf.mxu0
  %v195 = vpop.f32.mrf.mxu0
  %v196 = vadd.f32 0.0, %v195
  %v197 = vpop.f32.mrf.mxu0
  %198 = vdwg.mxu0
  %v199 = vpack.c.bf16 %v86, %v86
  %v201 = vsel %vm96, %v199, 0
  %203 = vmatprep.subr.bf16.mxu0 0
  %204 = vmatpush1.bf16.xpose.msra.mxu0 0
  %205 = vmatprep.subr.bf16.mxu0 0
  %206 = vmatpush1.bf16.xpose.msra.mxu0 0
  %207 = vmatprep.subr.bf16.mxu0 0
  %208 = vmatpush1.bf16.xpose.msra.mxu0 0
  %209 = vmatprep.subr.bf16.mxu0 0
  %210 = vmatpush1.bf16.xpose.msra.mxu0 0
  %211 = vmatprep.subr.bf16.mxu0 0
  %212 = vmatpush1.bf16.xpose.msra.mxu0 0
  %213 = vmatprep.subr.bf16.mxu0 0
  %214 = vmatpush1.bf16.xpose.msra.mxu0 0
  %215 = vmatprep.subr.bf16.mxu0 0
  %216 = vmatpush1.bf16.xpose.msra.mxu0 0
  %217 = vmatprep.subr.bf16.mxu0 0
  %218 = vmatpush1.bf16.xpose.msra.mxu0 %v148
  %219 = vmatprep.subr.bf16.mxu0 0
  %220 = vmatpush2.bf16.xpose.msra.mxu0 0
  %221 = vmatprep.subr.bf16.mxu0 0
  %222 = vmatpush2.bf16.xpose.msra.mxu0 0
  %223 = vmatprep.subr.bf16.mxu0 0
  %224 = vmatpush2.bf16.xpose.msra.mxu0 0
  %225 = vmatprep.subr.bf16.mxu0 0
  %226 = vmatpush2.bf16.xpose.msra.mxu0 0
  %227 = vmatprep.subr.bf16.mxu0 0
  %228 = vmatpush2.bf16.xpose.msra.mxu0 0
  %229 = vmatprep.subr.bf16.mxu0 0
  %230 = vmatpush2.bf16.xpose.msra.mxu0 0
  %231 = vmatprep.subr.bf16.mxu0 0
  %232 = vmatpush2.bf16.xpose.msra.mxu0 0
  %233 = vmatprep.subr.bf16.mxu0 0
  %234 = vmatpush2.bf16.xpose.msra.mxu0 0
  %235 = vmatprep.mubr.bf16.mxu0 0
  %236 = vmatmul.mubr.bf16.gmra.mxu0 %v201
  %v237 = vpop.f32.mrf.mxu0
  %v238 = vadd.f32 0.0, %v237
  %v239 = vpop.f32.mrf.mxu0
  %v240 = vpop.f32.mrf.mxu0
  %v241 = vpop.f32.mrf.mxu0
  %242 = vdwg.mxu0
  %v243 = vpack.c.bf16 %v188, %v185
  %v244 = vpack.c.bf16 %v196, %v193
  %v245 = vlaneseq
  %v246 = vshrl.u32 %v245, 7
  %v247 = vsub.s32 0, %v246
  %v248 = vrot.slane %v238, %v247
  %v250 = vsel %vm96, %v44, 0
  %v253 = vsel %vm96, %v45, 0
  %v256 = vsel %vm96, %v46, 0
  %v259 = vsel %vm96, %v47, 0
  %v262 = vsel %vm96, %v48, 0
  %v265 = vsel %vm96, %v49, 0
  %v268 = vsel %vm96, %v50, 0
  %v271 = vsel %vm96, %v51, 0
  %v274 = vsel %vm96, %v52, 0
  %v277 = vsel %vm96, %v53, 0
  %v280 = vsel %vm96, %v54, 0
  %v283 = vsel %vm96, %v55, 0
  %v286 = vsel %vm96, %v56, 0
  %v289 = vsel %vm96, %v57, 0
  %v292 = vsel %vm96, %v58, 0
  %v295 = vsel %vm96, %v59, 0
  %297 = vmatprep.subr.bf16.mxu0 0
  %298 = vmatpush1.bf16.msra.mxu0 0
  %299 = vmatprep.subr.bf16.mxu0 0
  %300 = vmatpush1.bf16.msra.mxu0 0
  %301 = vmatprep.subr.bf16.mxu0 0
  %302 = vmatpush1.bf16.msra.mxu0 0
  %303 = vmatprep.subr.bf16.mxu0 0
  %304 = vmatpush1.bf16.msra.mxu0 0
  %305 = vmatprep.subr.bf16.mxu0 0
  %306 = vmatpush1.bf16.msra.mxu0 0
  %307 = vmatprep.subr.bf16.mxu0 0
  %308 = vmatpush1.bf16.msra.mxu0 0
  %309 = vmatprep.subr.bf16.mxu0 0
  %310 = vmatpush1.bf16.msra.mxu0 %v244
  %311 = vmatprep.subr.bf16.mxu0 0
  %312 = vmatpush1.bf16.msra.mxu0 %v243
  %313 = vmatprep.subr.bf16.mxu0 0
  %314 = vmatpush2.bf16.msra.mxu0 0
  %315 = vmatprep.subr.bf16.mxu0 0
  %316 = vmatpush2.bf16.msra.mxu0 0
  %317 = vmatprep.subr.bf16.mxu0 0
  %318 = vmatpush2.bf16.msra.mxu0 0
  %319 = vmatprep.subr.bf16.mxu0 0
  %320 = vmatpush2.bf16.msra.mxu0 0
  %321 = vmatprep.subr.bf16.mxu0 0
  %322 = vmatpush2.bf16.msra.mxu0 0
  %323 = vmatprep.subr.bf16.mxu0 0
  %324 = vmatpush2.bf16.msra.mxu0 0
  %325 = vmatprep.subr.bf16.mxu0 0
  %326 = vmatpush2.bf16.msra.mxu0 0
  %327 = vmatprep.subr.bf16.mxu0 0
  %328 = vmatpush2.bf16.msra.mxu0 0
  %329 = vmatprep.mubr.bf16.mxu0 0
  %330 = vmatmul.mubr.bf16.gmra.mxu0 %v250
  %v331 = vpop.f32.mrf.mxu0
  %v332 = vadd.f32 %v248, %v331
  %v333 = vpop.f32.mrf.mxu0
  %v334 = vpop.f32.mrf.mxu0
  %v335 = vadd.f32 %v248, %v334
  %v336 = vpop.f32.mrf.mxu0
  %337 = vmatprep.mubr.bf16.mxu0 0
  %338 = vmatmul.mubr.bf16.gmra.mxu0 %v253
  %v339 = vpop.f32.mrf.mxu0
  %v340 = vadd.f32 %v248, %v339
  %v341 = vpop.f32.mrf.mxu0
  %v342 = vpop.f32.mrf.mxu0
  %v343 = vadd.f32 %v248, %v342
  %v344 = vpop.f32.mrf.mxu0
  %345 = vmatprep.mubr.bf16.mxu0 0
  %346 = vmatmul.mubr.bf16.gmra.mxu0 %v256
  %v347 = vpop.f32.mrf.mxu0
  %v348 = vadd.f32 %v248, %v347
  %v349 = vpop.f32.mrf.mxu0
  %v350 = vpop.f32.mrf.mxu0
  %v351 = vadd.f32 %v248, %v350
  %v352 = vpop.f32.mrf.mxu0
  %353 = vmatprep.mubr.bf16.mxu0 0
  %354 = vmatmul.mubr.bf16.gmra.mxu0 %v259
  %v355 = vpop.f32.mrf.mxu0
  %v356 = vadd.f32 %v248, %v355
  %v357 = vpop.f32.mrf.mxu0
  %v358 = vpop.f32.mrf.mxu0
  %v359 = vadd.f32 %v248, %v358
  %v360 = vpop.f32.mrf.mxu0
  %361 = vmatprep.mubr.bf16.mxu0 0
  %362 = vmatmul.mubr.bf16.gmra.mxu0 %v262
  %v363 = vpop.f32.mrf.mxu0
  %v364 = vadd.f32 %v248, %v363
  %v365 = vpop.f32.mrf.mxu0
  %v366 = vpop.f32.mrf.mxu0
  %v367 = vadd.f32 %v248, %v366
  %v368 = vpop.f32.mrf.mxu0
  %369 = vmatprep.mubr.bf16.mxu0 0
  %370 = vmatmul.mubr.bf16.gmra.mxu0 %v265
  %v371 = vpop.f32.mrf.mxu0
  %v372 = vadd.f32 %v248, %v371
  %v373 = vpop.f32.mrf.mxu0
  %v374 = vpop.f32.mrf.mxu0
  %v375 = vadd.f32 %v248, %v374
  %v376 = vpop.f32.mrf.mxu0
  %377 = vmatprep.mubr.bf16.mxu0 0
  %378 = vmatmul.mubr.bf16.gmra.mxu0 %v268
  %v379 = vpop.f32.mrf.mxu0
  %v380 = vadd.f32 %v248, %v379
  %v381 = vpop.f32.mrf.mxu0
  %v382 = vpop.f32.mrf.mxu0
  %v383 = vadd.f32 %v248, %v382
  %v384 = vpop.f32.mrf.mxu0
  %385 = vmatprep.mubr.bf16.mxu0 0
  %386 = vmatmul.mubr.bf16.gmra.mxu0 %v271
  %v387 = vpop.f32.mrf.mxu0
  %v388 = vadd.f32 %v248, %v387
  %v389 = vpop.f32.mrf.mxu0
  %v390 = vpop.f32.mrf.mxu0
  %v391 = vadd.f32 %v248, %v390
  %v392 = vpop.f32.mrf.mxu0
  %393 = vmatprep.mubr.bf16.mxu0 0
  %394 = vmatmul.mubr.bf16.gmra.mxu0 %v274
  %v395 = vpop.f32.mrf.mxu0
  %v396 = vadd.f32 %v248, %v395
  %v397 = vpop.f32.mrf.mxu0
  %v398 = vpop.f32.mrf.mxu0
  %v399 = vadd.f32 %v248, %v398
  %v400 = vpop.f32.mrf.mxu0
  %401 = vmatprep.mubr.bf16.mxu0 0
  %402 = vmatmul.mubr.bf16.gmra.mxu0 %v277
  %v403 = vpop.f32.mrf.mxu0
  %v404 = vadd.f32 %v248, %v403
  %v405 = vpop.f32.mrf.mxu0
  %v406 = vpop.f32.mrf.mxu0
  %v407 = vadd.f32 %v248, %v406
  %v408 = vpop.f32.mrf.mxu0
  %409 = vmatprep.mubr.bf16.mxu0 0
  %410 = vmatmul.mubr.bf16.gmra.mxu0 %v280
  %v411 = vpop.f32.mrf.mxu0
  %v412 = vadd.f32 %v248, %v411
  %v413 = vpop.f32.mrf.mxu0
  %v414 = vpop.f32.mrf.mxu0
  %v415 = vadd.f32 %v248, %v414
  %v416 = vpop.f32.mrf.mxu0
  %417 = vmatprep.mubr.bf16.mxu0 0
  %418 = vmatmul.mubr.bf16.gmra.mxu0 %v283
  %v419 = vpop.f32.mrf.mxu0
  %v420 = vadd.f32 %v248, %v419
  %v421 = vpop.f32.mrf.mxu0
  %v422 = vpop.f32.mrf.mxu0
  %v423 = vadd.f32 %v248, %v422
  %v424 = vpop.f32.mrf.mxu0
  %425 = vmatprep.mubr.bf16.mxu0 0
  %426 = vmatmul.mubr.bf16.gmra.mxu0 %v286
  %v427 = vpop.f32.mrf.mxu0
  %v428 = vadd.f32 %v248, %v427
  %v429 = vpop.f32.mrf.mxu0
  %v430 = vpop.f32.mrf.mxu0
  %v431 = vadd.f32 %v248, %v430
  %v432 = vpop.f32.mrf.mxu0
  %433 = vmatprep.mubr.bf16.mxu0 0
  %434 = vmatmul.mubr.bf16.gmra.mxu0 %v289
  %v435 = vpop.f32.mrf.mxu0
  %v436 = vadd.f32 %v248, %v435
  %v437 = vpop.f32.mrf.mxu0
  %v438 = vpop.f32.mrf.mxu0
  %v439 = vadd.f32 %v248, %v438
  %v440 = vpop.f32.mrf.mxu0
  %441 = vmatprep.mubr.bf16.mxu0 0
  %442 = vmatmul.mubr.bf16.gmra.mxu0 %v292
  %v443 = vpop.f32.mrf.mxu0
  %v444 = vadd.f32 %v248, %v443
  %v445 = vpop.f32.mrf.mxu0
  %v446 = vpop.f32.mrf.mxu0
  %v447 = vadd.f32 %v248, %v446
  %v448 = vpop.f32.mrf.mxu0
  %449 = vmatprep.mubr.bf16.mxu0 0
  %450 = vmatmul.mubr.bf16.gmra.mxu0 %v295
  %v451 = vpop.f32.mrf.mxu0
  %v452 = vadd.f32 %v248, %v451
  %v453 = vpop.f32.mrf.mxu0
  %v454 = vpop.f32.mrf.mxu0
  %v455 = vadd.f32 %v248, %v454
  %v456 = vpop.f32.mrf.mxu0
  %457 = vdwg.mxu0
  %vm458 = vcmask 64512
  %v459 = vsel %vm458, %v332, -inf
  %460 = vmax.xlane.f32.xlu0 %v459
  %v461 = vpop.xlane.xlu0 %460
  %v462 = vsel %vm458, %v335, -inf
  %463 = vmax.xlane.f32.xlu0 %v462
  %v464 = vpop.xlane.xlu0 %463
  %v465 = vsel %vm458, %v340, -inf
  %466 = vmax.xlane.f32.xlu0 %v465
  %v467 = vpop.xlane.xlu0 %466
  %v468 = vsel %vm458, %v343, -inf
  %469 = vmax.xlane.f32.xlu0 %v468
  %v470 = vpop.xlane.xlu0 %469
  %v471 = vsel %vm458, %v348, -inf
  %472 = vmax.xlane.f32.xlu0 %v471
  %v473 = vpop.xlane.xlu0 %472
  %v474 = vsel %vm458, %v351, -inf
  %475 = vmax.xlane.f32.xlu0 %v474
  %v476 = vpop.xlane.xlu0 %475
  %v477 = vsel %vm458, %v356, -inf
  %478 = vmax.xlane.f32.xlu0 %v477
  %v479 = vpop.xlane.xlu0 %478
  %v480 = vsel %vm458, %v359, -inf
  %481 = vmax.xlane.f32.xlu0 %v480
  %v482 = vpop.xlane.xlu0 %481
  %v483 = vsel %vm458, %v364, -inf
  %484 = vmax.xlane.f32.xlu0 %v483
  %v485 = vpop.xlane.xlu0 %484
  %v486 = vsel %vm458, %v367, -inf
  %487 = vmax.xlane.f32.xlu0 %v486
  %v488 = vpop.xlane.xlu0 %487
  %v489 = vsel %vm458, %v372, -inf
  %490 = vmax.xlane.f32.xlu0 %v489
  %v491 = vpop.xlane.xlu0 %490
  %v492 = vsel %vm458, %v375, -inf
  %493 = vmax.xlane.f32.xlu0 %v492
  %v494 = vpop.xlane.xlu0 %493
  %v495 = vsel %vm458, %v380, -inf
  %496 = vmax.xlane.f32.xlu0 %v495
  %v497 = vpop.xlane.xlu0 %496
  %v498 = vsel %vm458, %v383, -inf
  %499 = vmax.xlane.f32.xlu0 %v498
  %v500 = vpop.xlane.xlu0 %499
  %v501 = vsel %vm458, %v388, -inf
  %502 = vmax.xlane.f32.xlu0 %v501
  %v503 = vpop.xlane.xlu0 %502
  %v504 = vsel %vm458, %v391, -inf
  %505 = vmax.xlane.f32.xlu0 %v504
  %v506 = vpop.xlane.xlu0 %505
  %v507 = vsel %vm458, %v396, -inf
  %508 = vmax.xlane.f32.xlu0 %v507
  %v509 = vpop.xlane.xlu0 %508
  %v510 = vsel %vm458, %v399, -inf
  %511 = vmax.xlane.f32.xlu0 %v510
  %v512 = vpop.xlane.xlu0 %511
  %v513 = vsel %vm458, %v404, -inf
  %514 = vmax.xlane.f32.xlu0 %v513
  %v515 = vpop.xlane.xlu0 %514
  %v516 = vsel %vm458, %v407, -inf
  %517 = vmax.xlane.f32.xlu0 %v516
  %v518 = vpop.xlane.xlu0 %517
  %v519 = vsel %vm458, %v412, -inf
  %520 = vmax.xlane.f32.xlu0 %v519
  %v521 = vpop.xlane.xlu0 %520
  %v522 = vsel %vm458, %v415, -inf
  %523 = vmax.xlane.f32.xlu0 %v522
  %v524 = vpop.xlane.xlu0 %523
  %v525 = vsel %vm458, %v420, -inf
  %526 = vmax.xlane.f32.xlu0 %v525
  %v527 = vpop.xlane.xlu0 %526
  %v528 = vsel %vm458, %v423, -inf
  %529 = vmax.xlane.f32.xlu0 %v528
  %v530 = vpop.xlane.xlu0 %529
  %v531 = vsel %vm458, %v428, -inf
  %532 = vmax.xlane.f32.xlu0 %v531
  %v533 = vpop.xlane.xlu0 %532
  %v534 = vsel %vm458, %v431, -inf
  %535 = vmax.xlane.f32.xlu0 %v534
  %v536 = vpop.xlane.xlu0 %535
  %v537 = vsel %vm458, %v436, -inf
  %538 = vmax.xlane.f32.xlu0 %v537
  %v539 = vpop.xlane.xlu0 %538
  %v540 = vsel %vm458, %v439, -inf
  %541 = vmax.xlane.f32.xlu0 %v540
  %v542 = vpop.xlane.xlu0 %541
  %v543 = vsel %vm458, %v444, -inf
  %544 = vmax.xlane.f32.xlu0 %v543
  %v545 = vpop.xlane.xlu0 %544
  %v546 = vsel %vm458, %v447, -inf
  %547 = vmax.xlane.f32.xlu0 %v546
  %v548 = vpop.xlane.xlu0 %547
  %v549 = vsel %vm458, %v452, -inf
  %550 = vmax.xlane.f32.xlu0 %v549
  %v551 = vpop.xlane.xlu0 %550
  %v552 = vsel %vm458, %v455, -inf
  %553 = vmax.xlane.f32.xlu0 %v552
  %v554 = vpop.xlane.xlu0 %553
  %v555 = vsub.f32 %v332, %v461
  %v556 = vsub.f32 %v335, %v464
  %v557 = vsub.f32 %v340, %v467
  %v558 = vsub.f32 %v343, %v470
  %v559 = vsub.f32 %v348, %v473
  %v560 = vsub.f32 %v351, %v476
  %v561 = vsub.f32 %v356, %v479
  %v562 = vsub.f32 %v359, %v482
  %v563 = vsub.f32 %v364, %v485
  %v564 = vsub.f32 %v367, %v488
  %v565 = vsub.f32 %v372, %v491
  %v566 = vsub.f32 %v375, %v494
  %v567 = vsub.f32 %v380, %v497
  %v568 = vsub.f32 %v383, %v500
  %v569 = vsub.f32 %v388, %v503
  %v570 = vsub.f32 %v391, %v506
  %v571 = vsub.f32 %v396, %v509
  %v572 = vsub.f32 %v399, %v512
  %v573 = vsub.f32 %v404, %v515
  %v574 = vsub.f32 %v407, %v518
  %v575 = vsub.f32 %v412, %v521
  %v576 = vsub.f32 %v415, %v524
  %v577 = vsub.f32 %v420, %v527
  %v578 = vsub.f32 %v423, %v530
  %v579 = vsub.f32 %v428, %v533
  %v580 = vsub.f32 %v431, %v536
  %v581 = vsub.f32 %v436, %v539
  %v582 = vsub.f32 %v439, %v542
  %v583 = vsub.f32 %v444, %v545
  %v584 = vsub.f32 %v447, %v548
  %v585 = vsub.f32 %v452, %v551
  %v586 = vsub.f32 %v455, %v554
  %v587 = vmul.f32 %v555, 1.442695
  %v588 = vpow.pop %v587
  %v589 = vmul.f32 %v556, 1.442695
  %v590 = vpow.pop %v589
  %v591 = vmul.f32 %v557, 1.442695
  %v592 = vpow.pop %v591
  %v593 = vmul.f32 %v558, 1.442695
  %v594 = vpow.pop %v593
  %v595 = vmul.f32 %v559, 1.442695
  %v596 = vpow.pop %v595
  %v597 = vmul.f32 %v560, 1.442695
  %v598 = vpow.pop %v597
  %v599 = vmul.f32 %v561, 1.442695
  %v600 = vpow.pop %v599
  %v601 = vmul.f32 %v562, 1.442695
  %v602 = vpow.pop %v601
  %v603 = vmul.f32 %v563, 1.442695
  %v604 = vpow.pop %v603
  %v605 = vmul.f32 %v564, 1.442695
  %v606 = vpow.pop %v605
  %v607 = vmul.f32 %v565, 1.442695
  %v608 = vpow.pop %v607
  %v609 = vmul.f32 %v566, 1.442695
  %v610 = vpow.pop %v609
  %v611 = vmul.f32 %v567, 1.442695
  %v612 = vpow.pop %v611
  %v613 = vmul.f32 %v568, 1.442695
  %v614 = vpow.pop %v613
  %v615 = vmul.f32 %v569, 1.442695
  %v616 = vpow.pop %v615
  %v617 = vmul.f32 %v570, 1.442695
  %v618 = vpow.pop %v617
  %v619 = vmul.f32 %v571, 1.442695
  %v620 = vpow.pop %v619
  %v621 = vmul.f32 %v572, 1.442695
  %v622 = vpow.pop %v621
  %v623 = vmul.f32 %v573, 1.442695
  %v624 = vpow.pop %v623
  %v625 = vmul.f32 %v574, 1.442695
  %v626 = vpow.pop %v625
  %v627 = vmul.f32 %v575, 1.442695
  %v628 = vpow.pop %v627
  %v629 = vmul.f32 %v576, 1.442695
  %v630 = vpow.pop %v629
  %v631 = vmul.f32 %v577, 1.442695
  %v632 = vpow.pop %v631
  %v633 = vmul.f32 %v578, 1.442695
  %v634 = vpow.pop %v633
  %v635 = vmul.f32 %v579, 1.442695
  %v636 = vpow.pop %v635
  %v637 = vmul.f32 %v580, 1.442695
  %v638 = vpow.pop %v637
  %v639 = vmul.f32 %v581, 1.442695
  %v640 = vpow.pop %v639
  %v641 = vmul.f32 %v582, 1.442695
  %v642 = vpow.pop %v641
  %v643 = vmul.f32 %v583, 1.442695
  %v644 = vpow.pop %v643
  %v645 = vmul.f32 %v584, 1.442695
  %v646 = vpow.pop %v645
  %v647 = vmul.f32 %v585, 1.442695
  %v648 = vpow.pop %v647
  %v649 = vmul.f32 %v586, 1.442695
  %v650 = vpow.pop %v649
  %v651 = vsel %vm458, %v588, 0.0
  %652 = vadd.xlane.f32.xlu0 %v651
  %v653 = vpop.xlane.xlu0 %652
  %v654 = vsel %vm458, %v590, 0.0
  %655 = vadd.xlane.f32.xlu0 %v654
  %v656 = vpop.xlane.xlu0 %655
  %v657 = vsel %vm458, %v592, 0.0
  %658 = vadd.xlane.f32.xlu0 %v657
  %v659 = vpop.xlane.xlu0 %658
  %v660 = vsel %vm458, %v594, 0.0
  %661 = vadd.xlane.f32.xlu0 %v660
  %v662 = vpop.xlane.xlu0 %661
  %v663 = vsel %vm458, %v596, 0.0
  %664 = vadd.xlane.f32.xlu0 %v663
  %v665 = vpop.xlane.xlu0 %664
  %v666 = vsel %vm458, %v598, 0.0
  %667 = vadd.xlane.f32.xlu0 %v666
  %v668 = vpop.xlane.xlu0 %667
  %v669 = vsel %vm458, %v600, 0.0
  %670 = vadd.xlane.f32.xlu0 %v669
  %v671 = vpop.xlane.xlu0 %670
  %v672 = vsel %vm458, %v602, 0.0
  %673 = vadd.xlane.f32.xlu0 %v672
  %v674 = vpop.xlane.xlu0 %673
  %v675 = vsel %vm458, %v604, 0.0
  %676 = vadd.xlane.f32.xlu0 %v675
  %v677 = vpop.xlane.xlu0 %676
  %v678 = vsel %vm458, %v606, 0.0
  %679 = vadd.xlane.f32.xlu0 %v678
  %v680 = vpop.xlane.xlu0 %679
  %v681 = vsel %vm458, %v608, 0.0
  %682 = vadd.xlane.f32.xlu0 %v681
  %v683 = vpop.xlane.xlu0 %682
  %v684 = vsel %vm458, %v610, 0.0
  %685 = vadd.xlane.f32.xlu0 %v684
  %v686 = vpop.xlane.xlu0 %685
  %v687 = vsel %vm458, %v612, 0.0
  %688 = vadd.xlane.f32.xlu0 %v687
  %v689 = vpop.xlane.xlu0 %688
  %v690 = vsel %vm458, %v614, 0.0
  %691 = vadd.xlane.f32.xlu0 %v690
  %v692 = vpop.xlane.xlu0 %691
  %v693 = vsel %vm458, %v616, 0.0
  %694 = vadd.xlane.f32.xlu0 %v693
  %v695 = vpop.xlane.xlu0 %694
  %v696 = vsel %vm458, %v618, 0.0
  %697 = vadd.xlane.f32.xlu0 %v696
  %v698 = vpop.xlane.xlu0 %697
  %v699 = vsel %vm458, %v620, 0.0
  %700 = vadd.xlane.f32.xlu0 %v699
  %v701 = vpop.xlane.xlu0 %700
  %v702 = vsel %vm458, %v622, 0.0
  %703 = vadd.xlane.f32.xlu0 %v702
  %v704 = vpop.xlane.xlu0 %703
  %v705 = vsel %vm458, %v624, 0.0
  %706 = vadd.xlane.f32.xlu0 %v705
  %v707 = vpop.xlane.xlu0 %706
  %v708 = vsel %vm458, %v626, 0.0
  %709 = vadd.xlane.f32.xlu0 %v708
  %v710 = vpop.xlane.xlu0 %709
  %v711 = vsel %vm458, %v628, 0.0
  %712 = vadd.xlane.f32.xlu0 %v711
  %v713 = vpop.xlane.xlu0 %712
  %v714 = vsel %vm458, %v630, 0.0
  %715 = vadd.xlane.f32.xlu0 %v714
  %v716 = vpop.xlane.xlu0 %715
  %v717 = vsel %vm458, %v632, 0.0
  %718 = vadd.xlane.f32.xlu0 %v717
  %v719 = vpop.xlane.xlu0 %718
  %v720 = vsel %vm458, %v634, 0.0
  %721 = vadd.xlane.f32.xlu0 %v720
  %v722 = vpop.xlane.xlu0 %721
  %v723 = vsel %vm458, %v636, 0.0
  %724 = vadd.xlane.f32.xlu0 %v723
  %v725 = vpop.xlane.xlu0 %724
  %v726 = vsel %vm458, %v638, 0.0
  %727 = vadd.xlane.f32.xlu0 %v726
  %v728 = vpop.xlane.xlu0 %727
  %v729 = vsel %vm458, %v640, 0.0
  %730 = vadd.xlane.f32.xlu0 %v729
  %v731 = vpop.xlane.xlu0 %730
  %v732 = vsel %vm458, %v642, 0.0
  %733 = vadd.xlane.f32.xlu0 %v732
  %v734 = vpop.xlane.xlu0 %733
  %v735 = vsel %vm458, %v644, 0.0
  %736 = vadd.xlane.f32.xlu0 %v735
  %v737 = vpop.xlane.xlu0 %736
  %v738 = vsel %vm458, %v646, 0.0
  %739 = vadd.xlane.f32.xlu0 %v738
  %v740 = vpop.xlane.xlu0 %739
  %v741 = vsel %vm458, %v648, 0.0
  %742 = vadd.xlane.f32.xlu0 %v741
  %v743 = vpop.xlane.xlu0 %742
  %v744 = vsel %vm458, %v650, 0.0
  %745 = vadd.xlane.f32.xlu0 %v744
  %v746 = vpop.xlane.xlu0 %745
  %v747 = vrcp.pop %v653
  %v748 = vrcp.pop %v656
  %v749 = vrcp.pop %v659
  %v750 = vrcp.pop %v662
  %v751 = vrcp.pop %v665
  %v752 = vrcp.pop %v668
  %v753 = vrcp.pop %v671
  %v754 = vrcp.pop %v674
  %v755 = vrcp.pop %v677
  %v756 = vrcp.pop %v680
  %v757 = vrcp.pop %v683
  %v758 = vrcp.pop %v686
  %v759 = vrcp.pop %v689
  %v760 = vrcp.pop %v692
  %v761 = vrcp.pop %v695
  %v762 = vrcp.pop %v698
  %v763 = vrcp.pop %v701
  %v764 = vrcp.pop %v704
  %v765 = vrcp.pop %v707
  %v766 = vrcp.pop %v710
  %v767 = vrcp.pop %v713
  %v768 = vrcp.pop %v716
  %v769 = vrcp.pop %v719
  %v770 = vrcp.pop %v722
  %v771 = vrcp.pop %v725
  %v772 = vrcp.pop %v728
  %v773 = vrcp.pop %v731
  %v774 = vrcp.pop %v734
  %v775 = vrcp.pop %v737
  %v776 = vrcp.pop %v740
  %v777 = vrcp.pop %v743
  %v778 = vrcp.pop %v746
  %v779 = vmul.f32 %v588, %v747
  %v780 = vmul.f32 %v590, %v748
  %v781 = vmul.f32 %v592, %v749
  %v782 = vmul.f32 %v594, %v750
  %v783 = vmul.f32 %v596, %v751
  %v784 = vmul.f32 %v598, %v752
  %v785 = vmul.f32 %v600, %v753
  %v786 = vmul.f32 %v602, %v754
  %v787 = vmul.f32 %v604, %v755
  %v788 = vmul.f32 %v606, %v756
  %v789 = vmul.f32 %v608, %v757
  %v790 = vmul.f32 %v610, %v758
  %v791 = vmul.f32 %v612, %v759
  %v792 = vmul.f32 %v614, %v760
  %v793 = vmul.f32 %v616, %v761
  %v794 = vmul.f32 %v618, %v762
  %v795 = vmul.f32 %v620, %v763
  %v796 = vmul.f32 %v622, %v764
  %v797 = vmul.f32 %v624, %v765
  %v798 = vmul.f32 %v626, %v766
  %v799 = vmul.f32 %v628, %v767
  %v800 = vmul.f32 %v630, %v768
  %v801 = vmul.f32 %v632, %v769
  %v802 = vmul.f32 %v634, %v770
  %v803 = vmul.f32 %v636, %v771
  %v804 = vmul.f32 %v638, %v772
  %v805 = vmul.f32 %v640, %v773
  %v806 = vmul.f32 %v642, %v774
  %v807 = vmul.f32 %v644, %v775
  %v808 = vmul.f32 %v646, %v776
  %v809 = vmul.f32 %v648, %v777
  %v810 = vmul.f32 %v650, %v778
  %v811 = vpack.c.bf16 %v780, %v779
  %v812 = vpack.c.bf16 %v782, %v781
  %v813 = vpack.c.bf16 %v784, %v783
  %v814 = vpack.c.bf16 %v786, %v785
  %v815 = vpack.c.bf16 %v788, %v787
  %v816 = vpack.c.bf16 %v790, %v789
  %v817 = vpack.c.bf16 %v792, %v791
  %v818 = vpack.c.bf16 %v794, %v793
  %v819 = vpack.c.bf16 %v796, %v795
  %v820 = vpack.c.bf16 %v798, %v797
  %v821 = vpack.c.bf16 %v800, %v799
  %v822 = vpack.c.bf16 %v802, %v801
  %v823 = vpack.c.bf16 %v804, %v803
  %v824 = vpack.c.bf16 %v806, %v805
  %v825 = vpack.c.bf16 %v808, %v807
  %v826 = vpack.c.bf16 %v810, %v809
  %v828 = vsel %vm458, %v811, 0
  %v831 = vsel %vm458, %v812, 0
  %v834 = vsel %vm458, %v813, 0
  %v837 = vsel %vm458, %v814, 0
  %v840 = vsel %vm458, %v815, 0
  %v843 = vsel %vm458, %v816, 0
  %v846 = vsel %vm458, %v817, 0
  %v849 = vsel %vm458, %v818, 0
  %v852 = vsel %vm458, %v819, 0
  %v855 = vsel %vm458, %v820, 0
  %v858 = vsel %vm458, %v821, 0
  %v861 = vsel %vm458, %v822, 0
  %v864 = vsel %vm458, %v823, 0
  %v867 = vsel %vm458, %v824, 0
  %v870 = vsel %vm458, %v825, 0
  %v873 = vsel %vm458, %v826, 0
  %vm875 = vcmask 1043456
  %v876 = vsel %vm875, %v61, 0
  %878 = vmatprep.subr.bf16.mxu0 0
  %879 = vmatpush1.bf16.msra.mxu0 0
  %880 = vmatprep.subr.bf16.mxu0 0
  %881 = vmatpush1.bf16.msra.mxu0 0
  %882 = vmatprep.subr.bf16.mxu0 0
  %883 = vmatpush1.bf16.msra.mxu0 0
  %884 = vmatprep.subr.bf16.mxu0 0
  %885 = vmatpush1.bf16.msra.mxu0 0
  %886 = vmatprep.subr.bf16.mxu0 0
  %887 = vmatpush1.bf16.msra.mxu0 0
  %888 = vmatprep.subr.bf16.mxu0 0
  %889 = vmatpush1.bf16.msra.mxu0 0
  %890 = vmatprep.subr.bf16.mxu0 0
  %891 = vmatpush1.bf16.msra.mxu0 0
  %892 = vmatprep.subr.bf16.mxu0 0
  %893 = vmatpush1.bf16.msra.mxu0 %v876
  %894 = vmatprep.subr.bf16.mxu0 0
  %895 = vmatpush2.bf16.msra.mxu0 0
  %896 = vmatprep.subr.bf16.mxu0 0
  %897 = vmatpush2.bf16.msra.mxu0 0
  %898 = vmatprep.subr.bf16.mxu0 0
  %899 = vmatpush2.bf16.msra.mxu0 0
  %900 = vmatprep.subr.bf16.mxu0 0
  %901 = vmatpush2.bf16.msra.mxu0 0
  %902 = vmatprep.subr.bf16.mxu0 0
  %903 = vmatpush2.bf16.msra.mxu0 0
  %904 = vmatprep.subr.bf16.mxu0 0
  %905 = vmatpush2.bf16.msra.mxu0 0
  %906 = vmatprep.subr.bf16.mxu0 0
  %907 = vmatpush2.bf16.msra.mxu0 0
  %908 = vmatprep.subr.bf16.mxu0 0
  %909 = vmatpush2.bf16.msra.mxu0 0
  %910 = vmatprep.mubr.bf16.mxu0 0
  %911 = vmatmul.mubr.bf16.gmra.mxu0 %v828
  %v912 = vpop.f32.mrf.mxu0
  %v913 = vadd.f32 0.0, %v912
  %v914 = vpop.f32.mrf.mxu0
  %v915 = vpop.f32.mrf.mxu0
  %v916 = vadd.f32 0.0, %v915
  %v917 = vpop.f32.mrf.mxu0
  %918 = vmatprep.mubr.bf16.mxu0 0
  %919 = vmatmul.mubr.bf16.gmra.mxu0 %v831
  %v920 = vpop.f32.mrf.mxu0
  %v921 = vadd.f32 0.0, %v920
  %v922 = vpop.f32.mrf.mxu0
  %v923 = vpop.f32.mrf.mxu0
  %v924 = vadd.f32 0.0, %v923
  %v925 = vpop.f32.mrf.mxu0
  %926 = vmatprep.mubr.bf16.mxu0 0
  %927 = vmatmul.mubr.bf16.gmra.mxu0 %v834
  %v928 = vpop.f32.mrf.mxu0
  %v929 = vadd.f32 0.0, %v928
  %v930 = vpop.f32.mrf.mxu0
  %v931 = vpop.f32.mrf.mxu0
  %v932 = vadd.f32 0.0, %v931
  %v933 = vpop.f32.mrf.mxu0
  %934 = vmatprep.mubr.bf16.mxu0 0
  %935 = vmatmul.mubr.bf16.gmra.mxu0 %v837
  %v936 = vpop.f32.mrf.mxu0
  %v937 = vadd.f32 0.0, %v936
  %v938 = vpop.f32.mrf.mxu0
  %v939 = vpop.f32.mrf.mxu0
  %v940 = vadd.f32 0.0, %v939
  %v941 = vpop.f32.mrf.mxu0
  %942 = vmatprep.mubr.bf16.mxu0 0
  %943 = vmatmul.mubr.bf16.gmra.mxu0 %v840
  %v944 = vpop.f32.mrf.mxu0
  %v945 = vadd.f32 0.0, %v944
  %v946 = vpop.f32.mrf.mxu0
  %v947 = vpop.f32.mrf.mxu0
  %v948 = vadd.f32 0.0, %v947
  %v949 = vpop.f32.mrf.mxu0
  %950 = vmatprep.mubr.bf16.mxu0 0
  %951 = vmatmul.mubr.bf16.gmra.mxu0 %v843
  %v952 = vpop.f32.mrf.mxu0
  %v953 = vadd.f32 0.0, %v952
  %v954 = vpop.f32.mrf.mxu0
  %v955 = vpop.f32.mrf.mxu0
  %v956 = vadd.f32 0.0, %v955
  %v957 = vpop.f32.mrf.mxu0
  %958 = vmatprep.mubr.bf16.mxu0 0
  %959 = vmatmul.mubr.bf16.gmra.mxu0 %v846
  %v960 = vpop.f32.mrf.mxu0
  %v961 = vadd.f32 0.0, %v960
  %v962 = vpop.f32.mrf.mxu0
  %v963 = vpop.f32.mrf.mxu0
  %v964 = vadd.f32 0.0, %v963
  %v965 = vpop.f32.mrf.mxu0
  %966 = vmatprep.mubr.bf16.mxu0 0
  %967 = vmatmul.mubr.bf16.gmra.mxu0 %v849
  %v968 = vpop.f32.mrf.mxu0
  %v969 = vadd.f32 0.0, %v968
  %v970 = vpop.f32.mrf.mxu0
  %v971 = vpop.f32.mrf.mxu0
  %v972 = vadd.f32 0.0, %v971
  %v973 = vpop.f32.mrf.mxu0
  %974 = vmatprep.mubr.bf16.mxu0 0
  %975 = vmatmul.mubr.bf16.gmra.mxu0 %v852
  %v976 = vpop.f32.mrf.mxu0
  %v977 = vadd.f32 0.0, %v976
  %v978 = vpop.f32.mrf.mxu0
  %v979 = vpop.f32.mrf.mxu0
  %v980 = vadd.f32 0.0, %v979
  %v981 = vpop.f32.mrf.mxu0
  %982 = vmatprep.mubr.bf16.mxu0 0
  %983 = vmatmul.mubr.bf16.gmra.mxu0 %v855
  %v984 = vpop.f32.mrf.mxu0
  %v985 = vadd.f32 0.0, %v984
  %v986 = vpop.f32.mrf.mxu0
  %v987 = vpop.f32.mrf.mxu0
  %v988 = vadd.f32 0.0, %v987
  %v989 = vpop.f32.mrf.mxu0
  %990 = vmatprep.mubr.bf16.mxu0 0
  %991 = vmatmul.mubr.bf16.gmra.mxu0 %v858
  %v992 = vpop.f32.mrf.mxu0
  %v993 = vadd.f32 0.0, %v992
  %v994 = vpop.f32.mrf.mxu0
  %v995 = vpop.f32.mrf.mxu0
  %v996 = vadd.f32 0.0, %v995
  %v997 = vpop.f32.mrf.mxu0
  %998 = vmatprep.mubr.bf16.mxu0 0
  %999 = vmatmul.mubr.bf16.gmra.mxu0 %v861
  %v1000 = vpop.f32.mrf.mxu0
  %v1001 = vadd.f32 0.0, %v1000
  %v1002 = vpop.f32.mrf.mxu0
  %v1003 = vpop.f32.mrf.mxu0
  %v1004 = vadd.f32 0.0, %v1003
  %v1005 = vpop.f32.mrf.mxu0
  %1006 = vmatprep.mubr.bf16.mxu0 0
  %1007 = vmatmul.mubr.bf16.gmra.mxu0 %v864
  %v1008 = vpop.f32.mrf.mxu0
  %v1009 = vadd.f32 0.0, %v1008
  %v1010 = vpop.f32.mrf.mxu0
  %v1011 = vpop.f32.mrf.mxu0
  %v1012 = vadd.f32 0.0, %v1011
  %v1013 = vpop.f32.mrf.mxu0
  %1014 = vmatprep.mubr.bf16.mxu0 0
  %1015 = vmatmul.mubr.bf16.gmra.mxu0 %v867
  %v1016 = vpop.f32.mrf.mxu0
  %v1017 = vadd.f32 0.0, %v1016
  %v1018 = vpop.f32.mrf.mxu0
  %v1019 = vpop.f32.mrf.mxu0
  %v1020 = vadd.f32 0.0, %v1019
  %v1021 = vpop.f32.mrf.mxu0
  %1022 = vmatprep.mubr.bf16.mxu0 0
  %1023 = vmatmul.mubr.bf16.gmra.mxu0 %v870
  %v1024 = vpop.f32.mrf.mxu0
  %v1025 = vadd.f32 0.0, %v1024
  %v1026 = vpop.f32.mrf.mxu0
  %v1027 = vpop.f32.mrf.mxu0
  %v1028 = vadd.f32 0.0, %v1027
  %v1029 = vpop.f32.mrf.mxu0
  %1030 = vmatprep.mubr.bf16.mxu0 0
  %1031 = vmatmul.mubr.bf16.gmra.mxu0 %v873
  %v1032 = vpop.f32.mrf.mxu0
  %v1033 = vadd.f32 0.0, %v1032
  %v1034 = vpop.f32.mrf.mxu0
  %v1035 = vpop.f32.mrf.mxu0
  %v1036 = vadd.f32 0.0, %v1035
  %v1037 = vpop.f32.mrf.mxu0
  %1038 = vdwg.mxu0
  %v1039 = vadd.f32 %v913, %v12
  %v1040 = vadd.f32 %v916, %v13
  %v1041 = vadd.f32 %v921, %v14
  %v1042 = vadd.f32 %v924, %v15
  %v1043 = vadd.f32 %v929, %v16
  %v1044 = vadd.f32 %v932, %v17
  %v1045 = vadd.f32 %v937, %v18
  %v1046 = vadd.f32 %v940, %v19
  %v1047 = vadd.f32 %v945, %v20
  %v1048 = vadd.f32 %v948, %v21
  %v1049 = vadd.f32 %v953, %v22
  %v1050 = vadd.f32 %v956, %v23
  %v1051 = vadd.f32 %v961, %v24
  %v1052 = vadd.f32 %v964, %v25
  %v1053 = vadd.f32 %v969, %v26
  %v1054 = vadd.f32 %v972, %v27
  %v1055 = vadd.f32 %v977, %v28
  %v1056 = vadd.f32 %v980, %v29
  %v1057 = vadd.f32 %v985, %v30
  %v1058 = vadd.f32 %v988, %v31
  %v1059 = vadd.f32 %v993, %v32
  %v1060 = vadd.f32 %v996, %v33
  %v1061 = vadd.f32 %v1001, %v34
  %v1062 = vadd.f32 %v1004, %v35
  %v1063 = vadd.f32 %v1009, %v36
  %v1064 = vadd.f32 %v1012, %v37
  %v1065 = vadd.f32 %v1017, %v38
  %v1066 = vadd.f32 %v1020, %v39
  %v1067 = vadd.f32 %v1025, %v40
  %v1068 = vadd.f32 %v1028, %v41
  %v1069 = vadd.f32 %v1033, %v42
  %v1070 = vadd.f32 %v1036, %v43
  %v1071 = vpack.c.bf16 %v1040, %v1039
  %v1072 = vpack.c.bf16 %v1042, %v1041
  %v1073 = vpack.c.bf16 %v1044, %v1043
  %v1074 = vpack.c.bf16 %v1046, %v1045
  %v1075 = vpack.c.bf16 %v1048, %v1047
  %v1076 = vpack.c.bf16 %v1050, %v1049
  %v1077 = vpack.c.bf16 %v1052, %v1051
  %v1078 = vpack.c.bf16 %v1054, %v1053
  %v1079 = vpack.c.bf16 %v1056, %v1055
  %v1080 = vpack.c.bf16 %v1058, %v1057
  %v1081 = vpack.c.bf16 %v1060, %v1059
  %v1082 = vpack.c.bf16 %v1062, %v1061
  %v1083 = vpack.c.bf16 %v1064, %v1063
  %v1084 = vpack.c.bf16 %v1066, %v1065
  %v1085 = vpack.c.bf16 %v1068, %v1067
  %v1086 = vpack.c.bf16 %v1070, %v1069
  %v1087 = vlaneseq
  %v1088 = vshrl.u32 %v1087, 7
  %v1089 = vsub.s32 0, %v1088
  %v1090 = vrot.slane %v88, %v1089
  %v1092 = vsel %vm96, %v1071, 0
  %v1095 = vsel %vm96, %v1072, 0
  %v1098 = vsel %vm96, %v1073, 0
  %v1101 = vsel %vm96, %v1074, 0
  %v1104 = vsel %vm96, %v1075, 0
  %v1107 = vsel %vm96, %v1076, 0
  %v1110 = vsel %vm96, %v1077, 0
  %v1113 = vsel %vm96, %v1078, 0
  %v1116 = vsel %vm96, %v1079, 0
  %v1119 = vsel %vm96, %v1080, 0
  %v1122 = vsel %vm96, %v1081, 0
  %v1125 = vsel %vm96, %v1082, 0
  %v1128 = vsel %vm96, %v1083, 0
  %v1131 = vsel %vm96, %v1084, 0
  %v1134 = vsel %vm96, %v1085, 0
  %v1137 = vsel %vm96, %v1086, 0
  %1139 = vmatprep.subr.bf16.mxu0 0
  %1140 = vmatpush1.bf16.msra.mxu0 0
  %1141 = vmatprep.subr.bf16.mxu0 0
  %1142 = vmatpush1.bf16.msra.mxu0 0
  %1143 = vmatprep.subr.bf16.mxu0 0
  %1144 = vmatpush1.bf16.msra.mxu0 0
  %1145 = vmatprep.subr.bf16.mxu0 0
  %1146 = vmatpush1.bf16.msra.mxu0 0
  %1147 = vmatprep.subr.bf16.mxu0 0
  %1148 = vmatpush1.bf16.msra.mxu0 0
  %1149 = vmatprep.subr.bf16.mxu0 0
  %1150 = vmatpush1.bf16.msra.mxu0 0
  %1151 = vmatprep.subr.bf16.mxu0 0
  %1152 = vmatpush1.bf16.msra.mxu0 %v79
  %1153 = vmatprep.subr.bf16.mxu0 0
  %1154 = vmatpush1.bf16.msra.mxu0 %v78
  %1155 = vmatprep.subr.bf16.mxu0 0
  %1156 = vmatpush2.bf16.msra.mxu0 0
  %1157 = vmatprep.subr.bf16.mxu0 0
  %1158 = vmatpush2.bf16.msra.mxu0 0
  %1159 = vmatprep.subr.bf16.mxu0 0
  %1160 = vmatpush2.bf16.msra.mxu0 0
  %1161 = vmatprep.subr.bf16.mxu0 0
  %1162 = vmatpush2.bf16.msra.mxu0 0
  %1163 = vmatprep.subr.bf16.mxu0 0
  %1164 = vmatpush2.bf16.msra.mxu0 0
  %1165 = vmatprep.subr.bf16.mxu0 0
  %1166 = vmatpush2.bf16.msra.mxu0 0
  %1167 = vmatprep.subr.bf16.mxu0 0
  %1168 = vmatpush2.bf16.msra.mxu0 0
  %1169 = vmatprep.subr.bf16.mxu0 0
  %1170 = vmatpush2.bf16.msra.mxu0 0
  %1171 = vmatprep.mubr.bf16.mxu0 0
  %1172 = vmatmul.mubr.bf16.gmra.mxu0 %v1092
  %v1173 = vpop.f32.mrf.mxu0
  %v1174 = vadd.f32 %v1090, %v1173
  %v1175 = vpop.f32.mrf.mxu0
  %v1176 = vpop.f32.mrf.mxu0
  %v1177 = vadd.f32 %v1090, %v1176
  %v1178 = vpop.f32.mrf.mxu0
  %1179 = vmatprep.mubr.bf16.mxu0 0
  %1180 = vmatmul.mubr.bf16.gmra.mxu0 %v1095
  %v1181 = vpop.f32.mrf.mxu0
  %v1182 = vadd.f32 %v1090, %v1181
  %v1183 = vpop.f32.mrf.mxu0
  %v1184 = vpop.f32.mrf.mxu0
  %v1185 = vadd.f32 %v1090, %v1184
  %v1186 = vpop.f32.mrf.mxu0
  %1187 = vmatprep.mubr.bf16.mxu0 0
  %1188 = vmatmul.mubr.bf16.gmra.mxu0 %v1098
  %v1189 = vpop.f32.mrf.mxu0
  %v1190 = vadd.f32 %v1090, %v1189
  %v1191 = vpop.f32.mrf.mxu0
  %v1192 = vpop.f32.mrf.mxu0
  %v1193 = vadd.f32 %v1090, %v1192
  %v1194 = vpop.f32.mrf.mxu0
  %1195 = vmatprep.mubr.bf16.mxu0 0
  %1196 = vmatmul.mubr.bf16.gmra.mxu0 %v1101
  %v1197 = vpop.f32.mrf.mxu0
  %v1198 = vadd.f32 %v1090, %v1197
  %v1199 = vpop.f32.mrf.mxu0
  %v1200 = vpop.f32.mrf.mxu0
  %v1201 = vadd.f32 %v1090, %v1200
  %v1202 = vpop.f32.mrf.mxu0
  %1203 = vmatprep.mubr.bf16.mxu0 0
  %1204 = vmatmul.mubr.bf16.gmra.mxu0 %v1104
  %v1205 = vpop.f32.mrf.mxu0
  %v1206 = vadd.f32 %v1090, %v1205
  %v1207 = vpop.f32.mrf.mxu0
  %v1208 = vpop.f32.mrf.mxu0
  %v1209 = vadd.f32 %v1090, %v1208
  %v1210 = vpop.f32.mrf.mxu0
  %1211 = vmatprep.mubr.bf16.mxu0 0
  %1212 = vmatmul.mubr.bf16.gmra.mxu0 %v1107
  %v1213 = vpop.f32.mrf.mxu0
  %v1214 = vadd.f32 %v1090, %v1213
  %v1215 = vpop.f32.mrf.mxu0
  %v1216 = vpop.f32.mrf.mxu0
  %v1217 = vadd.f32 %v1090, %v1216
  %v1218 = vpop.f32.mrf.mxu0
  %1219 = vmatprep.mubr.bf16.mxu0 0
  %1220 = vmatmul.mubr.bf16.gmra.mxu0 %v1110
  %v1221 = vpop.f32.mrf.mxu0
  %v1222 = vadd.f32 %v1090, %v1221
  %v1223 = vpop.f32.mrf.mxu0
  %v1224 = vpop.f32.mrf.mxu0
  %v1225 = vadd.f32 %v1090, %v1224
  %v1226 = vpop.f32.mrf.mxu0
  %1227 = vmatprep.mubr.bf16.mxu0 0
  %1228 = vmatmul.mubr.bf16.gmra.mxu0 %v1113
  %v1229 = vpop.f32.mrf.mxu0
  %v1230 = vadd.f32 %v1090, %v1229
  %v1231 = vpop.f32.mrf.mxu0
  %v1232 = vpop.f32.mrf.mxu0
  %v1233 = vadd.f32 %v1090, %v1232
  %v1234 = vpop.f32.mrf.mxu0
  %1235 = vmatprep.mubr.bf16.mxu0 0
  %1236 = vmatmul.mubr.bf16.gmra.mxu0 %v1116
  %v1237 = vpop.f32.mrf.mxu0
  %v1238 = vadd.f32 %v1090, %v1237
  %v1239 = vpop.f32.mrf.mxu0
  %v1240 = vpop.f32.mrf.mxu0
  %v1241 = vadd.f32 %v1090, %v1240
  %v1242 = vpop.f32.mrf.mxu0
  %1243 = vmatprep.mubr.bf16.mxu0 0
  %1244 = vmatmul.mubr.bf16.gmra.mxu0 %v1119
  %v1245 = vpop.f32.mrf.mxu0
  %v1246 = vadd.f32 %v1090, %v1245
  %v1247 = vpop.f32.mrf.mxu0
  %v1248 = vpop.f32.mrf.mxu0
  %v1249 = vadd.f32 %v1090, %v1248
  %v1250 = vpop.f32.mrf.mxu0
  %1251 = vmatprep.mubr.bf16.mxu0 0
  %1252 = vmatmul.mubr.bf16.gmra.mxu0 %v1122
  %v1253 = vpop.f32.mrf.mxu0
  %v1254 = vadd.f32 %v1090, %v1253
  %v1255 = vpop.f32.mrf.mxu0
  %v1256 = vpop.f32.mrf.mxu0
  %v1257 = vadd.f32 %v1090, %v1256
  %v1258 = vpop.f32.mrf.mxu0
  %1259 = vmatprep.mubr.bf16.mxu0 0
  %1260 = vmatmul.mubr.bf16.gmra.mxu0 %v1125
  %v1261 = vpop.f32.mrf.mxu0
  %v1262 = vadd.f32 %v1090, %v1261
  %v1263 = vpop.f32.mrf.mxu0
  %v1264 = vpop.f32.mrf.mxu0
  %v1265 = vadd.f32 %v1090, %v1264
  %v1266 = vpop.f32.mrf.mxu0
  %1267 = vmatprep.mubr.bf16.mxu0 0
  %1268 = vmatmul.mubr.bf16.gmra.mxu0 %v1128
  %v1269 = vpop.f32.mrf.mxu0
  %v1270 = vadd.f32 %v1090, %v1269
  %v1271 = vpop.f32.mrf.mxu0
  %v1272 = vpop.f32.mrf.mxu0
  %v1273 = vadd.f32 %v1090, %v1272
  %v1274 = vpop.f32.mrf.mxu0
  %1275 = vmatprep.mubr.bf16.mxu0 0
  %1276 = vmatmul.mubr.bf16.gmra.mxu0 %v1131
  %v1277 = vpop.f32.mrf.mxu0
  %v1278 = vadd.f32 %v1090, %v1277
  %v1279 = vpop.f32.mrf.mxu0
  %v1280 = vpop.f32.mrf.mxu0
  %v1281 = vadd.f32 %v1090, %v1280
  %v1282 = vpop.f32.mrf.mxu0
  %1283 = vmatprep.mubr.bf16.mxu0 0
  %1284 = vmatmul.mubr.bf16.gmra.mxu0 %v1134
  %v1285 = vpop.f32.mrf.mxu0
  %v1286 = vadd.f32 %v1090, %v1285
  %v1287 = vpop.f32.mrf.mxu0
  %v1288 = vpop.f32.mrf.mxu0
  %v1289 = vadd.f32 %v1090, %v1288
  %v1290 = vpop.f32.mrf.mxu0
  %1291 = vmatprep.mubr.bf16.mxu0 0
  %1292 = vmatmul.mubr.bf16.gmra.mxu0 %v1137
  %v1293 = vpop.f32.mrf.mxu0
  %v1294 = vadd.f32 %v1090, %v1293
  %v1295 = vpop.f32.mrf.mxu0
  %v1296 = vpop.f32.mrf.mxu0
  %v1297 = vadd.f32 %v1090, %v1296
  %v1298 = vpop.f32.mrf.mxu0
  %1299 = vdwg.mxu0
  %v1300 = vmax.f32 %v1174, 0.0
  %v1301 = vmax.f32 %v1177, 0.0
  %v1302 = vmax.f32 %v1182, 0.0
  %v1303 = vmax.f32 %v1185, 0.0
  %v1304 = vmax.f32 %v1190, 0.0
  %v1305 = vmax.f32 %v1193, 0.0
  %v1306 = vmax.f32 %v1198, 0.0
  %v1307 = vmax.f32 %v1201, 0.0
  %v1308 = vmax.f32 %v1206, 0.0
  %v1309 = vmax.f32 %v1209, 0.0
  %v1310 = vmax.f32 %v1214, 0.0
  %v1311 = vmax.f32 %v1217, 0.0
  %v1312 = vmax.f32 %v1222, 0.0
  %v1313 = vmax.f32 %v1225, 0.0
  %v1314 = vmax.f32 %v1230, 0.0
  %v1315 = vmax.f32 %v1233, 0.0
  %v1316 = vmax.f32 %v1238, 0.0
  %v1317 = vmax.f32 %v1241, 0.0
  %v1318 = vmax.f32 %v1246, 0.0
  %v1319 = vmax.f32 %v1249, 0.0
  %v1320 = vmax.f32 %v1254, 0.0
  %v1321 = vmax.f32 %v1257, 0.0
  %v1322 = vmax.f32 %v1262, 0.0
  %v1323 = vmax.f32 %v1265, 0.0
  %v1324 = vmax.f32 %v1270, 0.0
  %v1325 = vmax.f32 %v1273, 0.0
  %v1326 = vmax.f32 %v1278, 0.0
  %v1327 = vmax.f32 %v1281, 0.0
  %v1328 = vmax.f32 %v1286, 0.0
  %v1329 = vmax.f32 %v1289, 0.0
  %v1330 = vmax.f32 %v1294, 0.0
  %v1331 = vmax.f32 %v1297, 0.0
  %v1332 = vpack.c.bf16 %v1301, %v1300
  %v1333 = vpack.c.bf16 %v1303, %v1302
  %v1334 = vpack.c.bf16 %v1305, %v1304
  %v1335 = vpack.c.bf16 %v1307, %v1306
  %v1336 = vpack.c.bf16 %v1309, %v1308
  %v1337 = vpack.c.bf16 %v1311, %v1310
  %v1338 = vpack.c.bf16 %v1313, %v1312
  %v1339 = vpack.c.bf16 %v1315, %v1314
  %v1340 = vpack.c.bf16 %v1317, %v1316
  %v1341 = vpack.c.bf16 %v1319, %v1318
  %v1342 = vpack.c.bf16 %v1321, %v1320
  %v1343 = vpack.c.bf16 %v1323, %v1322
  %v1344 = vpack.c.bf16 %v1325, %v1324
  %v1345 = vpack.c.bf16 %v1327, %v1326
  %v1346 = vpack.c.bf16 %v1329, %v1328
  %v1347 = vpack.c.bf16 %v1331, %v1330
  %v1348 = vlaneseq
  %v1349 = vshrl.u32 %v1348, 7
  %v1350 = vsub.s32 0, %v1349
  %v1351 = vrot.slane %v89, %v1350
  %v1353 = vsel %vm96, %v1332, 0
  %v1356 = vsel %vm96, %v1333, 0
  %v1359 = vsel %vm96, %v1334, 0
  %v1362 = vsel %vm96, %v1335, 0
  %v1365 = vsel %vm96, %v1336, 0
  %v1368 = vsel %vm96, %v1337, 0
  %v1371 = vsel %vm96, %v1338, 0
  %v1374 = vsel %vm96, %v1339, 0
  %v1377 = vsel %vm96, %v1340, 0
  %v1380 = vsel %vm96, %v1341, 0
  %v1383 = vsel %vm96, %v1342, 0
  %v1386 = vsel %vm96, %v1343, 0
  %v1389 = vsel %vm96, %v1344, 0
  %v1392 = vsel %vm96, %v1345, 0
  %v1395 = vsel %vm96, %v1346, 0
  %v1398 = vsel %vm96, %v1347, 0
  %1400 = vmatprep.subr.bf16.mxu0 0
  %1401 = vmatpush1.bf16.msra.mxu0 0
  %1402 = vmatprep.subr.bf16.mxu0 0
  %1403 = vmatpush1.bf16.msra.mxu0 0
  %1404 = vmatprep.subr.bf16.mxu0 0
  %1405 = vmatpush1.bf16.msra.mxu0 0
  %1406 = vmatprep.subr.bf16.mxu0 0
  %1407 = vmatpush1.bf16.msra.mxu0 0
  %1408 = vmatprep.subr.bf16.mxu0 0
  %1409 = vmatpush1.bf16.msra.mxu0 0
  %1410 = vmatprep.subr.bf16.mxu0 0
  %1411 = vmatpush1.bf16.msra.mxu0 0
  %1412 = vmatprep.subr.bf16.mxu0 0
  %1413 = vmatpush1.bf16.msra.mxu0 %v85
  %1414 = vmatprep.subr.bf16.mxu0 0
  %1415 = vmatpush1.bf16.msra.mxu0 %v84
  %1416 = vmatprep.subr.bf16.mxu0 0
  %1417 = vmatpush2.bf16.msra.mxu0 0
  %1418 = vmatprep.subr.bf16.mxu0 0
  %1419 = vmatpush2.bf16.msra.mxu0 0
  %1420 = vmatprep.subr.bf16.mxu0 0
  %1421 = vmatpush2.bf16.msra.mxu0 0
  %1422 = vmatprep.subr.bf16.mxu0 0
  %1423 = vmatpush2.bf16.msra.mxu0 0
  %1424 = vmatprep.subr.bf16.mxu0 0
  %1425 = vmatpush2.bf16.msra.mxu0 0
  %1426 = vmatprep.subr.bf16.mxu0 0
  %1427 = vmatpush2.bf16.msra.mxu0 0
  %1428 = vmatprep.subr.bf16.mxu0 0
  %1429 = vmatpush2.bf16.msra.mxu0 0
  %1430 = vmatprep.subr.bf16.mxu0 0
  %1431 = vmatpush2.bf16.msra.mxu0 0
  %1432 = vmatprep.mubr.bf16.mxu0 0
  %1433 = vmatmul.mubr.bf16.gmra.mxu0 %v1353
  %v1434 = vpop.f32.mrf.mxu0
  %v1435 = vadd.f32 %v1351, %v1434
  %v1436 = vpop.f32.mrf.mxu0
  %v1437 = vpop.f32.mrf.mxu0
  %v1438 = vadd.f32 %v1351, %v1437
  %v1439 = vpop.f32.mrf.mxu0
  %1440 = vmatprep.mubr.bf16.mxu0 0
  %1441 = vmatmul.mubr.bf16.gmra.mxu0 %v1356
  %v1442 = vpop.f32.mrf.mxu0
  %v1443 = vadd.f32 %v1351, %v1442
  %v1444 = vpop.f32.mrf.mxu0
  %v1445 = vpop.f32.mrf.mxu0
  %v1446 = vadd.f32 %v1351, %v1445
  %v1447 = vpop.f32.mrf.mxu0
  %1448 = vmatprep.mubr.bf16.mxu0 0
  %1449 = vmatmul.mubr.bf16.gmra.mxu0 %v1359
  %v1450 = vpop.f32.mrf.mxu0
  %v1451 = vadd.f32 %v1351, %v1450
  %v1452 = vpop.f32.mrf.mxu0
  %v1453 = vpop.f32.mrf.mxu0
  %v1454 = vadd.f32 %v1351, %v1453
  %v1455 = vpop.f32.mrf.mxu0
  %1456 = vmatprep.mubr.bf16.mxu0 0
  %1457 = vmatmul.mubr.bf16.gmra.mxu0 %v1362
  %v1458 = vpop.f32.mrf.mxu0
  %v1459 = vadd.f32 %v1351, %v1458
  %v1460 = vpop.f32.mrf.mxu0
  %v1461 = vpop.f32.mrf.mxu0
  %v1462 = vadd.f32 %v1351, %v1461
  %v1463 = vpop.f32.mrf.mxu0
  %1464 = vmatprep.mubr.bf16.mxu0 0
  %1465 = vmatmul.mubr.bf16.gmra.mxu0 %v1365
  %v1466 = vpop.f32.mrf.mxu0
  %v1467 = vadd.f32 %v1351, %v1466
  %v1468 = vpop.f32.mrf.mxu0
  %v1469 = vpop.f32.mrf.mxu0
  %v1470 = vadd.f32 %v1351, %v1469
  %v1471 = vpop.f32.mrf.mxu0
  %1472 = vmatprep.mubr.bf16.mxu0 0
  %1473 = vmatmul.mubr.bf16.gmra.mxu0 %v1368
  %v1474 = vpop.f32.mrf.mxu0
  %v1475 = vadd.f32 %v1351, %v1474
  %v1476 = vpop.f32.mrf.mxu0
  %v1477 = vpop.f32.mrf.mxu0
  %v1478 = vadd.f32 %v1351, %v1477
  %v1479 = vpop.f32.mrf.mxu0
  %1480 = vmatprep.mubr.bf16.mxu0 0
  %1481 = vmatmul.mubr.bf16.gmra.mxu0 %v1371
  %v1482 = vpop.f32.mrf.mxu0
  %v1483 = vadd.f32 %v1351, %v1482
  %v1484 = vpop.f32.mrf.mxu0
  %v1485 = vpop.f32.mrf.mxu0
  %v1486 = vadd.f32 %v1351, %v1485
  %v1487 = vpop.f32.mrf.mxu0
  %1488 = vmatprep.mubr.bf16.mxu0 0
  %1489 = vmatmul.mubr.bf16.gmra.mxu0 %v1374
  %v1490 = vpop.f32.mrf.mxu0
  %v1491 = vadd.f32 %v1351, %v1490
  %v1492 = vpop.f32.mrf.mxu0
  %v1493 = vpop.f32.mrf.mxu0
  %v1494 = vadd.f32 %v1351, %v1493
  %v1495 = vpop.f32.mrf.mxu0
  %1496 = vmatprep.mubr.bf16.mxu0 0
  %1497 = vmatmul.mubr.bf16.gmra.mxu0 %v1377
  %v1498 = vpop.f32.mrf.mxu0
  %v1499 = vadd.f32 %v1351, %v1498
  %v1500 = vpop.f32.mrf.mxu0
  %v1501 = vpop.f32.mrf.mxu0
  %v1502 = vadd.f32 %v1351, %v1501
  %v1503 = vpop.f32.mrf.mxu0
  %1504 = vmatprep.mubr.bf16.mxu0 0
  %1505 = vmatmul.mubr.bf16.gmra.mxu0 %v1380
  %v1506 = vpop.f32.mrf.mxu0
  %v1507 = vadd.f32 %v1351, %v1506
  %v1508 = vpop.f32.mrf.mxu0
  %v1509 = vpop.f32.mrf.mxu0
  %v1510 = vadd.f32 %v1351, %v1509
  %v1511 = vpop.f32.mrf.mxu0
  %1512 = vmatprep.mubr.bf16.mxu0 0
  %1513 = vmatmul.mubr.bf16.gmra.mxu0 %v1383
  %v1514 = vpop.f32.mrf.mxu0
  %v1515 = vadd.f32 %v1351, %v1514
  %v1516 = vpop.f32.mrf.mxu0
  %v1517 = vpop.f32.mrf.mxu0
  %v1518 = vadd.f32 %v1351, %v1517
  %v1519 = vpop.f32.mrf.mxu0
  %1520 = vmatprep.mubr.bf16.mxu0 0
  %1521 = vmatmul.mubr.bf16.gmra.mxu0 %v1386
  %v1522 = vpop.f32.mrf.mxu0
  %v1523 = vadd.f32 %v1351, %v1522
  %v1524 = vpop.f32.mrf.mxu0
  %v1525 = vpop.f32.mrf.mxu0
  %v1526 = vadd.f32 %v1351, %v1525
  %v1527 = vpop.f32.mrf.mxu0
  %1528 = vmatprep.mubr.bf16.mxu0 0
  %1529 = vmatmul.mubr.bf16.gmra.mxu0 %v1389
  %v1530 = vpop.f32.mrf.mxu0
  %v1531 = vadd.f32 %v1351, %v1530
  %v1532 = vpop.f32.mrf.mxu0
  %v1533 = vpop.f32.mrf.mxu0
  %v1534 = vadd.f32 %v1351, %v1533
  %v1535 = vpop.f32.mrf.mxu0
  %1536 = vmatprep.mubr.bf16.mxu0 0
  %1537 = vmatmul.mubr.bf16.gmra.mxu0 %v1392
  %v1538 = vpop.f32.mrf.mxu0
  %v1539 = vadd.f32 %v1351, %v1538
  %v1540 = vpop.f32.mrf.mxu0
  %v1541 = vpop.f32.mrf.mxu0
  %v1542 = vadd.f32 %v1351, %v1541
  %v1543 = vpop.f32.mrf.mxu0
  %1544 = vmatprep.mubr.bf16.mxu0 0
  %1545 = vmatmul.mubr.bf16.gmra.mxu0 %v1395
  %v1546 = vpop.f32.mrf.mxu0
  %v1547 = vadd.f32 %v1351, %v1546
  %v1548 = vpop.f32.mrf.mxu0
  %v1549 = vpop.f32.mrf.mxu0
  %v1550 = vadd.f32 %v1351, %v1549
  %v1551 = vpop.f32.mrf.mxu0
  %1552 = vmatprep.mubr.bf16.mxu0 0
  %1553 = vmatmul.mubr.bf16.gmra.mxu0 %v1398
  %v1554 = vpop.f32.mrf.mxu0
  %v1555 = vadd.f32 %v1351, %v1554
  %v1556 = vpop.f32.mrf.mxu0
  %v1557 = vpop.f32.mrf.mxu0
  %v1558 = vadd.f32 %v1351, %v1557
  %v1559 = vpop.f32.mrf.mxu0
  %1560 = vdwg.mxu0
  %v1561 = vadd.f32 %v1435, %v913
  %v1562 = vadd.f32 %v1438, %v916
  %v1563 = vadd.f32 %v1443, %v921
  %v1564 = vadd.f32 %v1446, %v924
  %v1565 = vadd.f32 %v1451, %v929
  %v1566 = vadd.f32 %v1454, %v932
  %v1567 = vadd.f32 %v1459, %v937
  %v1568 = vadd.f32 %v1462, %v940
  %v1569 = vadd.f32 %v1467, %v945
  %v1570 = vadd.f32 %v1470, %v948
  %v1571 = vadd.f32 %v1475, %v953
  %v1572 = vadd.f32 %v1478, %v956
  %v1573 = vadd.f32 %v1483, %v961
  %v1574 = vadd.f32 %v1486, %v964
  %v1575 = vadd.f32 %v1491, %v969
  %v1576 = vadd.f32 %v1494, %v972
  %v1577 = vadd.f32 %v1499, %v977
  %v1578 = vadd.f32 %v1502, %v980
  %v1579 = vadd.f32 %v1507, %v985
  %v1580 = vadd.f32 %v1510, %v988
  %v1581 = vadd.f32 %v1515, %v993
  %v1582 = vadd.f32 %v1518, %v996
  %v1583 = vadd.f32 %v1523, %v1001
  %v1584 = vadd.f32 %v1526, %v1004
  %v1585 = vadd.f32 %v1531, %v1009
  %v1586 = vadd.f32 %v1534, %v1012
  %v1587 = vadd.f32 %v1539, %v1017
  %v1588 = vadd.f32 %v1542, %v1020
  %v1589 = vadd.f32 %v1547, %v1025
  %v1590 = vadd.f32 %v1550, %v1028
  %v1591 = vadd.f32 %v1555, %v1033
  %v1592 = vadd.f32 %v1558, %v1036
  %v1593 = vsel %vm96, %v1561, 0.0
  %1594 = vadd.xlane.f32.xlu0 %v1593
  %v1595 = vpop.xlane.xlu0 %1594
  %v1596 = vsel %vm96, %v1562, 0.0
  %1597 = vadd.xlane.f32.xlu0 %v1596
  %v1598 = vpop.xlane.xlu0 %1597
  %v1599 = vsel %vm96, %v1563, 0.0
  %1600 = vadd.xlane.f32.xlu0 %v1599
  %v1601 = vpop.xlane.xlu0 %1600
  %v1602 = vsel %vm96, %v1564, 0.0
  %1603 = vadd.xlane.f32.xlu0 %v1602
  %v1604 = vpop.xlane.xlu0 %1603
  %v1605 = vsel %vm96, %v1565, 0.0
  %1606 = vadd.xlane.f32.xlu0 %v1605
  %v1607 = vpop.xlane.xlu0 %1606
  %v1608 = vsel %vm96, %v1566, 0.0
  %1609 = vadd.xlane.f32.xlu0 %v1608
  %v1610 = vpop.xlane.xlu0 %1609
  %v1611 = vsel %vm96, %v1567, 0.0
  %1612 = vadd.xlane.f32.xlu0 %v1611
  %v1613 = vpop.xlane.xlu0 %1612
  %v1614 = vsel %vm96, %v1568, 0.0
  %1615 = vadd.xlane.f32.xlu0 %v1614
  %v1616 = vpop.xlane.xlu0 %1615
  %v1617 = vsel %vm96, %v1569, 0.0
  %1618 = vadd.xlane.f32.xlu0 %v1617
  %v1619 = vpop.xlane.xlu0 %1618
  %v1620 = vsel %vm96, %v1570, 0.0
  %1621 = vadd.xlane.f32.xlu0 %v1620
  %v1622 = vpop.xlane.xlu0 %1621
  %v1623 = vsel %vm96, %v1571, 0.0
  %1624 = vadd.xlane.f32.xlu0 %v1623
  %v1625 = vpop.xlane.xlu0 %1624
  %v1626 = vsel %vm96, %v1572, 0.0
  %1627 = vadd.xlane.f32.xlu0 %v1626
  %v1628 = vpop.xlane.xlu0 %1627
  %v1629 = vsel %vm96, %v1573, 0.0
  %1630 = vadd.xlane.f32.xlu0 %v1629
  %v1631 = vpop.xlane.xlu0 %1630
  %v1632 = vsel %vm96, %v1574, 0.0
  %1633 = vadd.xlane.f32.xlu0 %v1632
  %v1634 = vpop.xlane.xlu0 %1633
  %v1635 = vsel %vm96, %v1575, 0.0
  %1636 = vadd.xlane.f32.xlu0 %v1635
  %v1637 = vpop.xlane.xlu0 %1636
  %v1638 = vsel %vm96, %v1576, 0.0
  %1639 = vadd.xlane.f32.xlu0 %v1638
  %v1640 = vpop.xlane.xlu0 %1639
  %v1641 = vsel %vm96, %v1577, 0.0
  %1642 = vadd.xlane.f32.xlu0 %v1641
  %v1643 = vpop.xlane.xlu0 %1642
  %v1644 = vsel %vm96, %v1578, 0.0
  %1645 = vadd.xlane.f32.xlu0 %v1644
  %v1646 = vpop.xlane.xlu0 %1645
  %v1647 = vsel %vm96, %v1579, 0.0
  %1648 = vadd.xlane.f32.xlu0 %v1647
  %v1649 = vpop.xlane.xlu0 %1648
  %v1650 = vsel %vm96, %v1580, 0.0
  %1651 = vadd.xlane.f32.xlu0 %v1650
  %v1652 = vpop.xlane.xlu0 %1651
  %v1653 = vsel %vm96, %v1581, 0.0
  %1654 = vadd.xlane.f32.xlu0 %v1653
  %v1655 = vpop.xlane.xlu0 %1654
  %v1656 = vsel %vm96, %v1582, 0.0
  %1657 = vadd.xlane.f32.xlu0 %v1656
  %v1658 = vpop.xlane.xlu0 %1657
  %v1659 = vsel %vm96, %v1583, 0.0
  %1660 = vadd.xlane.f32.xlu0 %v1659
  %v1661 = vpop.xlane.xlu0 %1660
  %v1662 = vsel %vm96, %v1584, 0.0
  %1663 = vadd.xlane.f32.xlu0 %v1662
  %v1664 = vpop.xlane.xlu0 %1663
  %v1665 = vsel %vm96, %v1585, 0.0
  %1666 = vadd.xlane.f32.xlu0 %v1665
  %v1667 = vpop.xlane.xlu0 %1666
  %v1668 = vsel %vm96, %v1586, 0.0
  %1669 = vadd.xlane.f32.xlu0 %v1668
  %v1670 = vpop.xlane.xlu0 %1669
  %v1671 = vsel %vm96, %v1587, 0.0
  %1672 = vadd.xlane.f32.xlu0 %v1671
  %v1673 = vpop.xlane.xlu0 %1672
  %v1674 = vsel %vm96, %v1588, 0.0
  %1675 = vadd.xlane.f32.xlu0 %v1674
  %v1676 = vpop.xlane.xlu0 %1675
  %v1677 = vsel %vm96, %v1589, 0.0
  %1678 = vadd.xlane.f32.xlu0 %v1677
  %v1679 = vpop.xlane.xlu0 %1678
  %v1680 = vsel %vm96, %v1590, 0.0
  %1681 = vadd.xlane.f32.xlu0 %v1680
  %v1682 = vpop.xlane.xlu0 %1681
  %v1683 = vsel %vm96, %v1591, 0.0
  %1684 = vadd.xlane.f32.xlu0 %v1683
  %v1685 = vpop.xlane.xlu0 %1684
  %v1686 = vsel %vm96, %v1592, 0.0
  %1687 = vadd.xlane.f32.xlu0 %v1686
  %v1688 = vpop.xlane.xlu0 %1687
  %v1689 = vrcp.pop 32.0
  %v1690 = vmul.f32 %v1595, %v1689
  %v1691 = vmul.f32 %v1598, %v1689
  %v1692 = vmul.f32 %v1601, %v1689
  %v1693 = vmul.f32 %v1604, %v1689
  %v1694 = vmul.f32 %v1607, %v1689
  %v1695 = vmul.f32 %v1610, %v1689
  %v1696 = vmul.f32 %v1613, %v1689
  %v1697 = vmul.f32 %v1616, %v1689
  %v1698 = vmul.f32 %v1619, %v1689
  %v1699 = vmul.f32 %v1622, %v1689
  %v1700 = vmul.f32 %v1625, %v1689
  %v1701 = vmul.f32 %v1628, %v1689
  %v1702 = vmul.f32 %v1631, %v1689
  %v1703 = vmul.f32 %v1634, %v1689
  %v1704 = vmul.f32 %v1637, %v1689
  %v1705 = vmul.f32 %v1640, %v1689
  %v1706 = vmul.f32 %v1643, %v1689
  %v1707 = vmul.f32 %v1646, %v1689
  %v1708 = vmul.f32 %v1649, %v1689
  %v1709 = vmul.f32 %v1652, %v1689
  %v1710 = vmul.f32 %v1655, %v1689
  %v1711 = vmul.f32 %v1658, %v1689
  %v1712 = vmul.f32 %v1661, %v1689
  %v1713 = vmul.f32 %v1664, %v1689
  %v1714 = vmul.f32 %v1667, %v1689
  %v1715 = vmul.f32 %v1670, %v1689
  %v1716 = vmul.f32 %v1673, %v1689
  %v1717 = vmul.f32 %v1676, %v1689
  %v1718 = vmul.f32 %v1679, %v1689
  %v1719 = vmul.f32 %v1682, %v1689
  %v1720 = vmul.f32 %v1685, %v1689
  %v1721 = vmul.f32 %v1688, %v1689
  %v1722 = vsub.f32 %v1561, %v1690
  %v1723 = vsub.f32 %v1562, %v1691
  %v1724 = vsub.f32 %v1563, %v1692
  %v1725 = vsub.f32 %v1564, %v1693
  %v1726 = vsub.f32 %v1565, %v1694
  %v1727 = vsub.f32 %v1566, %v1695
  %v1728 = vsub.f32 %v1567, %v1696
  %v1729 = vsub.f32 %v1568, %v1697
  %v1730 = vsub.f32 %v1569, %v1698
  %v1731 = vsub.f32 %v1570, %v1699
  %v1732 = vsub.f32 %v1571, %v1700
  %v1733 = vsub.f32 %v1572, %v1701
  %v1734 = vsub.f32 %v1573, %v1702
  %v1735 = vsub.f32 %v1574, %v1703
  %v1736 = vsub.f32 %v1575, %v1704
  %v1737 = vsub.f32 %v1576, %v1705
  %v1738 = vsub.f32 %v1577, %v1706
  %v1739 = vsub.f32 %v1578, %v1707
  %v1740 = vsub.f32 %v1579, %v1708
  %v1741 = vsub.f32 %v1580, %v1709
  %v1742 = vsub.f32 %v1581, %v1710
  %v1743 = vsub.f32 %v1582, %v1711
  %v1744 = vsub.f32 %v1583, %v1712
  %v1745 = vsub.f32 %v1584, %v1713
  %v1746 = vsub.f32 %v1585, %v1714
  %v1747 = vsub.f32 %v1586, %v1715
  %v1748 = vsub.f32 %v1587, %v1716
  %v1749 = vsub.f32 %v1588, %v1717
  %v1750 = vsub.f32 %v1589, %v1718
  %v1751 = vsub.f32 %v1590, %v1719
  %v1752 = vsub.f32 %v1591, %v1720
  %v1753 = vsub.f32 %v1592, %v1721
  %v1754 = vmul.f32 %v1722, %v1722
  %v1755 = vmul.f32 %v1723, %v1723
  %v1756 = vmul.f32 %v1724, %v1724
  %v1757 = vmul.f32 %v1725, %v1725
  %v1758 = vmul.f32 %v1726, %v1726
  %v1759 = vmul.f32 %v1727, %v1727
  %v1760 = vmul.f32 %v1728, %v1728
  %v1761 = vmul.f32 %v1729, %v1729
  %v1762 = vmul.f32 %v1730, %v1730
  %v1763 = vmul.f32 %v1731, %v1731
  %v1764 = vmul.f32 %v1732, %v1732
  %v1765 = vmul.f32 %v1733, %v1733
  %v1766 = vmul.f32 %v1734, %v1734
  %v1767 = vmul.f32 %v1735, %v1735
  %v1768 = vmul.f32 %v1736, %v1736
  %v1769 = vmul.f32 %v1737, %v1737
  %v1770 = vmul.f32 %v1738, %v1738
  %v1771 = vmul.f32 %v1739, %v1739
  %v1772 = vmul.f32 %v1740, %v1740
  %v1773 = vmul.f32 %v1741, %v1741
  %v1774 = vmul.f32 %v1742, %v1742
  %v1775 = vmul.f32 %v1743, %v1743
  %v1776 = vmul.f32 %v1744, %v1744
  %v1777 = vmul.f32 %v1745, %v1745
  %v1778 = vmul.f32 %v1746, %v1746
  %v1779 = vmul.f32 %v1747, %v1747
  %v1780 = vmul.f32 %v1748, %v1748
  %v1781 = vmul.f32 %v1749, %v1749
  %v1782 = vmul.f32 %v1750, %v1750
  %v1783 = vmul.f32 %v1751, %v1751
  %v1784 = vmul.f32 %v1752, %v1752
  %v1785 = vmul.f32 %v1753, %v1753
  %v1786 = vsel %vm96, %v1754, 0.0
  %1787 = vadd.xlane.f32.xlu0 %v1786
  %v1788 = vpop.xlane.xlu0 %1787
  %v1789 = vsel %vm96, %v1755, 0.0
  %1790 = vadd.xlane.f32.xlu0 %v1789
  %v1791 = vpop.xlane.xlu0 %1790
  %v1792 = vsel %vm96, %v1756, 0.0
  %1793 = vadd.xlane.f32.xlu0 %v1792
  %v1794 = vpop.xlane.xlu0 %1793
  %v1795 = vsel %vm96, %v1757, 0.0
  %1796 = vadd.xlane.f32.xlu0 %v1795
  %v1797 = vpop.xlane.xlu0 %1796
  %v1798 = vsel %vm96, %v1758, 0.0
  %1799 = vadd.xlane.f32.xlu0 %v1798
  %v1800 = vpop.xlane.xlu0 %1799
  %v1801 = vsel %vm96, %v1759, 0.0
  %1802 = vadd.xlane.f32.xlu0 %v1801
  %v1803 = vpop.xlane.xlu0 %1802
  %v1804 = vsel %vm96, %v1760, 0.0
  %1805 = vadd.xlane.f32.xlu0 %v1804
  %v1806 = vpop.xlane.xlu0 %1805
  %v1807 = vsel %vm96, %v1761, 0.0
  %1808 = vadd.xlane.f32.xlu0 %v1807
  %v1809 = vpop.xlane.xlu0 %1808
  %v1810 = vsel %vm96, %v1762, 0.0
  %1811 = vadd.xlane.f32.xlu0 %v1810
  %v1812 = vpop.xlane.xlu0 %1811
  %v1813 = vsel %vm96, %v1763, 0.0
  %1814 = vadd.xlane.f32.xlu0 %v1813
  %v1815 = vpop.xlane.xlu0 %1814
  %v1816 = vsel %vm96, %v1764, 0.0
  %1817 = vadd.xlane.f32.xlu0 %v1816
  %v1818 = vpop.xlane.xlu0 %1817
  %v1819 = vsel %vm96, %v1765, 0.0
  %1820 = vadd.xlane.f32.xlu0 %v1819
  %v1821 = vpop.xlane.xlu0 %1820
  %v1822 = vsel %vm96, %v1766, 0.0
  %1823 = vadd.xlane.f32.xlu0 %v1822
  %v1824 = vpop.xlane.xlu0 %1823
  %v1825 = vsel %vm96, %v1767, 0.0
  %1826 = vadd.xlane.f32.xlu0 %v1825
  %v1827 = vpop.xlane.xlu0 %1826
  %v1828 = vsel %vm96, %v1768, 0.0
  %1829 = vadd.xlane.f32.xlu0 %v1828
  %v1830 = vpop.xlane.xlu0 %1829
  %v1831 = vsel %vm96, %v1769, 0.0
  %1832 = vadd.xlane.f32.xlu0 %v1831
  %v1833 = vpop.xlane.xlu0 %1832
  %v1834 = vsel %vm96, %v1770, 0.0
  %1835 = vadd.xlane.f32.xlu0 %v1834
  %v1836 = vpop.xlane.xlu0 %1835
  %v1837 = vsel %vm96, %v1771, 0.0
  %1838 = vadd.xlane.f32.xlu0 %v1837
  %v1839 = vpop.xlane.xlu0 %1838
  %v1840 = vsel %vm96, %v1772, 0.0
  %1841 = vadd.xlane.f32.xlu0 %v1840
  %v1842 = vpop.xlane.xlu0 %1841
  %v1843 = vsel %vm96, %v1773, 0.0
  %1844 = vadd.xlane.f32.xlu0 %v1843
  %v1845 = vpop.xlane.xlu0 %1844
  %v1846 = vsel %vm96, %v1774, 0.0
  %1847 = vadd.xlane.f32.xlu0 %v1846
  %v1848 = vpop.xlane.xlu0 %1847
  %v1849 = vsel %vm96, %v1775, 0.0
  %1850 = vadd.xlane.f32.xlu0 %v1849
  %v1851 = vpop.xlane.xlu0 %1850
  %v1852 = vsel %vm96, %v1776, 0.0
  %1853 = vadd.xlane.f32.xlu0 %v1852
  %v1854 = vpop.xlane.xlu0 %1853
  %v1855 = vsel %vm96, %v1777, 0.0
  %1856 = vadd.xlane.f32.xlu0 %v1855
  %v1857 = vpop.xlane.xlu0 %1856
  %v1858 = vsel %vm96, %v1778, 0.0
  %1859 = vadd.xlane.f32.xlu0 %v1858
  %v1860 = vpop.xlane.xlu0 %1859
  %v1861 = vsel %vm96, %v1779, 0.0
  %1862 = vadd.xlane.f32.xlu0 %v1861
  %v1863 = vpop.xlane.xlu0 %1862
  %v1864 = vsel %vm96, %v1780, 0.0
  %1865 = vadd.xlane.f32.xlu0 %v1864
  %v1866 = vpop.xlane.xlu0 %1865
  %v1867 = vsel %vm96, %v1781, 0.0
  %1868 = vadd.xlane.f32.xlu0 %v1867
  %v1869 = vpop.xlane.xlu0 %1868
  %v1870 = vsel %vm96, %v1782, 0.0
  %1871 = vadd.xlane.f32.xlu0 %v1870
  %v1872 = vpop.xlane.xlu0 %1871
  %v1873 = vsel %vm96, %v1783, 0.0
  %1874 = vadd.xlane.f32.xlu0 %v1873
  %v1875 = vpop.xlane.xlu0 %1874
  %v1876 = vsel %vm96, %v1784, 0.0
  %1877 = vadd.xlane.f32.xlu0 %v1876
  %v1878 = vpop.xlane.xlu0 %1877
  %v1879 = vsel %vm96, %v1785, 0.0
  %1880 = vadd.xlane.f32.xlu0 %v1879
  %v1881 = vpop.xlane.xlu0 %1880
  %v1882 = vmul.f32 %v1788, %v1689
  %v1883 = vmul.f32 %v1791, %v1689
  %v1884 = vmul.f32 %v1794, %v1689
  %v1885 = vmul.f32 %v1797, %v1689
  %v1886 = vmul.f32 %v1800, %v1689
  %v1887 = vmul.f32 %v1803, %v1689
  %v1888 = vmul.f32 %v1806, %v1689
  %v1889 = vmul.f32 %v1809, %v1689
  %v1890 = vmul.f32 %v1812, %v1689
  %v1891 = vmul.f32 %v1815, %v1689
  %v1892 = vmul.f32 %v1818, %v1689
  %v1893 = vmul.f32 %v1821, %v1689
  %v1894 = vmul.f32 %v1824, %v1689
  %v1895 = vmul.f32 %v1827, %v1689
  %v1896 = vmul.f32 %v1830, %v1689
  %v1897 = vmul.f32 %v1833, %v1689
  %v1898 = vmul.f32 %v1836, %v1689
  %v1899 = vmul.f32 %v1839, %v1689
  %v1900 = vmul.f32 %v1842, %v1689
  %v1901 = vmul.f32 %v1845, %v1689
  %v1902 = vmul.f32 %v1848, %v1689
  %v1903 = vmul.f32 %v1851, %v1689
  %v1904 = vmul.f32 %v1854, %v1689
  %v1905 = vmul.f32 %v1857, %v1689
  %v1906 = vmul.f32 %v1860, %v1689
  %v1907 = vmul.f32 %v1863, %v1689
  %v1908 = vmul.f32 %v1866, %v1689
  %v1909 = vmul.f32 %v1869, %v1689
  %v1910 = vmul.f32 %v1872, %v1689
  %v1911 = vmul.f32 %v1875, %v1689
  %v1912 = vmul.f32 %v1878, %v1689
  %v1913 = vmul.f32 %v1881, %v1689
  %v1914 = vadd.f32 %v1882, 1e-05
  %v1915 = vadd.f32 %v1883, 1e-05
  %v1916 = vadd.f32 %v1884, 1e-05
  %v1917 = vadd.f32 %v1885, 1e-05
  %v1918 = vadd.f32 %v1886, 1e-05
  %v1919 = vadd.f32 %v1887, 1e-05
  %v1920 = vadd.f32 %v1888, 1e-05
  %v1921 = vadd.f32 %v1889, 1e-05
  %v1922 = vadd.f32 %v1890, 1e-05
  %v1923 = vadd.f32 %v1891, 1e-05
  %v1924 = vadd.f32 %v1892, 1e-05
  %v1925 = vadd.f32 %v1893, 1e-05
  %v1926 = vadd.f32 %v1894, 1e-05
  %v1927 = vadd.f32 %v1895, 1e-05
  %v1928 = vadd.f32 %v1896, 1e-05
  %v1929 = vadd.f32 %v1897, 1e-05
  %v1930 = vadd.f32 %v1898, 1e-05
  %v1931 = vadd.f32 %v1899, 1e-05
  %v1932 = vadd.f32 %v1900, 1e-05
  %v1933 = vadd.f32 %v1901, 1e-05
  %v1934 = vadd.f32 %v1902, 1e-05
  %v1935 = vadd.f32 %v1903, 1e-05
  %v1936 = vadd.f32 %v1904, 1e-05
  %v1937 = vadd.f32 %v1905, 1e-05
  %v1938 = vadd.f32 %v1906, 1e-05
  %v1939 = vadd.f32 %v1907, 1e-05
  %v1940 = vadd.f32 %v1908, 1e-05
  %v1941 = vadd.f32 %v1909, 1e-05
  %v1942 = vadd.f32 %v1910, 1e-05
  %v1943 = vadd.f32 %v1911, 1e-05
  %v1944 = vadd.f32 %v1912, 1e-05
  %v1945 = vadd.f32 %v1913, 1e-05
  %v1946 = vrsqrt.pop %v1914
  %v1947 = vrsqrt.pop %v1915
  %v1948 = vrsqrt.pop %v1916
  %v1949 = vrsqrt.pop %v1917
  %v1950 = vrsqrt.pop %v1918
  %v1951 = vrsqrt.pop %v1919
  %v1952 = vrsqrt.pop %v1920
  %v1953 = vrsqrt.pop %v1921
  %v1954 = vrsqrt.pop %v1922
  %v1955 = vrsqrt.pop %v1923
  %v1956 = vrsqrt.pop %v1924
  %v1957 = vrsqrt.pop %v1925
  %v1958 = vrsqrt.pop %v1926
  %v1959 = vrsqrt.pop %v1927
  %v1960 = vrsqrt.pop %v1928
  %v1961 = vrsqrt.pop %v1929
  %v1962 = vrsqrt.pop %v1930
  %v1963 = vrsqrt.pop %v1931
  %v1964 = vrsqrt.pop %v1932
  %v1965 = vrsqrt.pop %v1933
  %v1966 = vrsqrt.pop %v1934
  %v1967 = vrsqrt.pop %v1935
  %v1968 = vrsqrt.pop %v1936
  %v1969 = vrsqrt.pop %v1937
  %v1970 = vrsqrt.pop %v1938
  %v1971 = vrsqrt.pop %v1939
  %v1972 = vrsqrt.pop %v1940
  %v1973 = vrsqrt.pop %v1941
  %v1974 = vrsqrt.pop %v1942
  %v1975 = vrsqrt.pop %v1943
  %v1976 = vrsqrt.pop %v1944
  %v1977 = vrsqrt.pop %v1945
  %v1978 = vmul.f32 %v1722, %v1946
  %v1979 = vmul.f32 %v1723, %v1947
  %v1980 = vmul.f32 %v1724, %v1948
  %v1981 = vmul.f32 %v1725, %v1949
  %v1982 = vmul.f32 %v1726, %v1950
  %v1983 = vmul.f32 %v1727, %v1951
  %v1984 = vmul.f32 %v1728, %v1952
  %v1985 = vmul.f32 %v1729, %v1953
  %v1986 = vmul.f32 %v1730, %v1954
  %v1987 = vmul.f32 %v1731, %v1955
  %v1988 = vmul.f32 %v1732, %v1956
  %v1989 = vmul.f32 %v1733, %v1957
  %v1990 = vmul.f32 %v1734, %v1958
  %v1991 = vmul.f32 %v1735, %v1959
  %v1992 = vmul.f32 %v1736, %v1960
  %v1993 = vmul.f32 %v1737, %v1961
  %v1994 = vmul.f32 %v1738, %v1962
  %v1995 = vmul.f32 %v1739, %v1963
  %v1996 = vmul.f32 %v1740, %v1964
  %v1997 = vmul.f32 %v1741, %v1965
  %v1998 = vmul.f32 %v1742, %v1966
  %v1999 = vmul.f32 %v1743, %v1967
  %v2000 = vmul.f32 %v1744, %v1968
  %v2001 = vmul.f32 %v1745, %v1969
  %v2002 = vmul.f32 %v1746, %v1970
  %v2003 = vmul.f32 %v1747, %v1971
  %v2004 = vmul.f32 %v1748, %v1972
  %v2005 = vmul.f32 %v1749, %v1973
  %v2006 = vmul.f32 %v1750, %v1974
  %v2007 = vmul.f32 %v1751, %v1975
  %v2008 = vmul.f32 %v1752, %v1976
  %v2009 = vmul.f32 %v1753, %v1977
  %v2010 = vlaneseq
  %v2011 = vshrl.u32 %v2010, 7
  %v2012 = vsub.s32 0, %v2011
  %v2013 = vrot.slane %v90, %v2012
  %v2014 = vmul.f32 %v1978, %v2013
  %v2015 = vmul.f32 %v1979, %v2013
  %v2016 = vmul.f32 %v1980, %v2013
  %v2017 = vmul.f32 %v1981, %v2013
  %v2018 = vmul.f32 %v1982, %v2013
  %v2019 = vmul.f32 %v1983, %v2013
  %v2020 = vmul.f32 %v1984, %v2013
  %v2021 = vmul.f32 %v1985, %v2013
  %v2022 = vmul.f32 %v1986, %v2013
  %v2023 = vmul.f32 %v1987, %v2013
  %v2024 = vmul.f32 %v1988, %v2013
  %v2025 = vmul.f32 %v1989, %v2013
  %v2026 = vmul.f32 %v1990, %v2013
  %v2027 = vmul.f32 %v1991, %v2013
  %v2028 = vmul.f32 %v1992, %v2013
  %v2029 = vmul.f32 %v1993, %v2013
  %v2030 = vmul.f32 %v1994, %v2013
  %v2031 = vmul.f32 %v1995, %v2013
  %v2032 = vmul.f32 %v1996, %v2013
  %v2033 = vmul.f32 %v1997, %v2013
  %v2034 = vmul.f32 %v1998, %v2013
  %v2035 = vmul.f32 %v1999, %v2013
  %v2036 = vmul.f32 %v2000, %v2013
  %v2037 = vmul.f32 %v2001, %v2013
  %v2038 = vmul.f32 %v2002, %v2013
  %v2039 = vmul.f32 %v2003, %v2013
  %v2040 = vmul.f32 %v2004, %v2013
  %v2041 = vmul.f32 %v2005, %v2013
  %v2042 = vmul.f32 %v2006, %v2013
  %v2043 = vmul.f32 %v2007, %v2013
  %v2044 = vmul.f32 %v2008, %v2013
  %v2045 = vmul.f32 %v2009, %v2013
  %v2046 = vlaneseq
  %v2047 = vshrl.u32 %v2046, 7
  %v2048 = vsub.s32 0, %v2047
  %v2049 = vrot.slane %v91, %v2048
  %v2050 = vadd.f32 %v2014, %v2049
  %v2051 = vadd.f32 %v2015, %v2049
  %v2052 = vadd.f32 %v2016, %v2049
  %v2053 = vadd.f32 %v2017, %v2049
  %v2054 = vadd.f32 %v2018, %v2049
  %v2055 = vadd.f32 %v2019, %v2049
  %v2056 = vadd.f32 %v2020, %v2049
  %v2057 = vadd.f32 %v2021, %v2049
  %v2058 = vadd.f32 %v2022, %v2049
  %v2059 = vadd.f32 %v2023, %v2049
  %v2060 = vadd.f32 %v2024, %v2049
  %v2061 = vadd.f32 %v2025, %v2049
  %v2062 = vadd.f32 %v2026, %v2049
  %v2063 = vadd.f32 %v2027, %v2049
  %v2064 = vadd.f32 %v2028, %v2049
  %v2065 = vadd.f32 %v2029, %v2049
  %v2066 = vadd.f32 %v2030, %v2049
  %v2067 = vadd.f32 %v2031, %v2049
  %v2068 = vadd.f32 %v2032, %v2049
  %v2069 = vadd.f32 %v2033, %v2049
  %v2070 = vadd.f32 %v2034, %v2049
  %v2071 = vadd.f32 %v2035, %v2049
  %v2072 = vadd.f32 %v2036, %v2049
  %v2073 = vadd.f32 %v2037, %v2049
  %v2074 = vadd.f32 %v2038, %v2049
  %v2075 = vadd.f32 %v2039, %v2049
  %v2076 = vadd.f32 %v2040, %v2049
  %v2077 = vadd.f32 %v2041, %v2049
  %v2078 = vadd.f32 %v2042, %v2049
  %v2079 = vadd.f32 %v2043, %v2049
  %v2080 = vadd.f32 %v2044, %v2049
  %v2081 = vadd.f32 %v2045, %v2049
  %2114 = vrot.lane.b32.xlu0 %v2050, 32
  %v2115 = vpop.permute.xlu0 %2114
  %2116 = vrot.lane.b32.xlu0 %v2051, 32
  %v2117 = vpop.permute.xlu0 %2116
  %2118 = vrot.lane.b32.xlu0 %v2052, 32
  %v2119 = vpop.permute.xlu0 %2118
  %2120 = vrot.lane.b32.xlu0 %v2053, 32
  %v2121 = vpop.permute.xlu0 %2120
  %2122 = vrot.lane.b32.xlu0 %v2054, 32
  %v2123 = vpop.permute.xlu0 %2122
  %2124 = vrot.lane.b32.xlu0 %v2055, 32
  %v2125 = vpop.permute.xlu0 %2124
  %2126 = vrot.lane.b32.xlu0 %v2056, 32
  %v2127 = vpop.permute.xlu0 %2126
  %2128 = vrot.lane.b32.xlu0 %v2057, 32
  %v2129 = vpop.permute.xlu0 %2128
  %2130 = vrot.lane.b32.xlu0 %v2058, 32
  %v2131 = vpop.permute.xlu0 %2130
  %2132 = vrot.lane.b32.xlu0 %v2059, 32
  %v2133 = vpop.permute.xlu0 %2132
  %2134 = vrot.lane.b32.xlu0 %v2060, 32
  %v2135 = vpop.permute.xlu0 %2134
  %2136 = vrot.lane.b32.xlu0 %v2061, 32
  %v2137 = vpop.permute.xlu0 %2136
  %2138 = vrot.lane.b32.xlu0 %v2062, 32
  %v2139 = vpop.permute.xlu0 %2138
  %2140 = vrot.lane.b32.xlu0 %v2063, 32
  %v2141 = vpop.permute.xlu0 %2140
  %2142 = vrot.lane.b32.xlu0 %v2064, 32
  %v2143 = vpop.permute.xlu0 %2142
  %2144 = vrot.lane.b32.xlu0 %v2065, 32
  %v2145 = vpop.permute.xlu0 %2144
  %2146 = vrot.lane.b32.xlu0 %v2066, 32
  %v2147 = vpop.permute.xlu0 %2146
  %2148 = vrot.lane.b32.xlu0 %v2067, 32
  %v2149 = vpop.permute.xlu0 %2148
  %2150 = vrot.lane.b32.xlu0 %v2068, 32
  %v2151 = vpop.permute.xlu0 %2150
  %2152 = vrot.lane.b32.xlu0 %v2069, 32
  %v2153 = vpop.permute.xlu0 %2152
  %2154 = vrot.lane.b32.xlu0 %v2070, 32
  %v2155 = vpop.permute.xlu0 %2154
  %2156 = vrot.lane.b32.xlu0 %v2071, 32
  %v2157 = vpop.permute.xlu0 %2156
  %2158 = vrot.lane.b32.xlu0 %v2072, 32
  %v2159 = vpop.permute.xlu0 %2158
  %2160 = vrot.lane.b32.xlu0 %v2073, 32
  %v2161 = vpop.permute.xlu0 %2160
  %2162 = vrot.lane.b32.xlu0 %v2074, 32
  %v2163 = vpop.permute.xlu0 %2162
  %2164 = vrot.lane.b32.xlu0 %v2075, 32
  %v2165 = vpop.permute.xlu0 %2164
  %2166 = vrot.lane.b32.xlu0 %v2076, 32
  %v2167 = vpop.permute.xlu0 %2166
  %2168 = vrot.lane.b32.xlu0 %v2077, 32
  %v2169 = vpop.permute.xlu0 %2168
  %2170 = vrot.lane.b32.xlu0 %v2078, 32
  %v2171 = vpop.permute.xlu0 %2170
  %2172 = vrot.lane.b32.xlu0 %v2079, 32
  %v2173 = vpop.permute.xlu0 %2172
  %2174 = vrot.lane.b32.xlu0 %v2080, 32
  %v2175 = vpop.permute.xlu0 %2174
  %2176 = vrot.lane.b32.xlu0 %v2081, 32
  %v2177 = vpop.permute.xlu0 %2176
  %v2210 = vsel %vm96, %v913, %v2115
  %v2211 = vsel %vm96, %v916, %v2117
  %v2212 = vsel %vm96, %v921, %v2119
  %v2213 = vsel %vm96, %v924, %v2121
  %v2214 = vsel %vm96, %v929, %v2123
  %v2215 = vsel %vm96, %v932, %v2125
  %v2216 = vsel %vm96, %v937, %v2127
  %v2217 = vsel %vm96, %v940, %v2129
  %v2218 = vsel %vm96, %v945, %v2131
  %v2219 = vsel %vm96, %v948, %v2133
  %v2220 = vsel %vm96, %v953, %v2135
  %v2221 = vsel %vm96, %v956, %v2137
  %v2222 = vsel %vm96, %v961, %v2139
  %v2223 = vsel %vm96, %v964, %v2141
  %v2224 = vsel %vm96, %v969, %v2143
  %v2225 = vsel %vm96, %v972, %v2145
  %v2226 = vsel %vm96, %v977, %v2147
  %v2227 = vsel %vm96, %v980, %v2149
  %v2228 = vsel %vm96, %v985, %v2151
  %v2229 = vsel %vm96, %v988, %v2153
  %v2230 = vsel %vm96, %v993, %v2155
  %v2231 = vsel %vm96, %v996, %v2157
  %v2232 = vsel %vm96, %v1001, %v2159
  %v2233 = vsel %vm96, %v1004, %v2161
  %v2234 = vsel %vm96, %v1009, %v2163
  %v2235 = vsel %vm96, %v1012, %v2165
  %v2236 = vsel %vm96, %v1017, %v2167
  %v2237 = vsel %vm96, %v1020, %v2169
  %v2238 = vsel %vm96, %v1025, %v2171
  %v2239 = vsel %vm96, %v1028, %v2173
  %v2240 = vsel %vm96, %v1033, %v2175
  %v2241 = vsel %vm96, %v1036, %v2177
  %vm2242 = vcmask 523264
  %2243 = vst.msk [vmem:[%s2] sm:$0xff] %vm2242, %v2210
  %2244 = vst.msk [vmem:[%s2 + $0x8] sm:$0xff] %vm2242, %v2211
  %2245 = vst.msk [vmem:[%s2 + $0x10] sm:$0xff] %vm2242, %v2212
  %2246 = vst.msk [vmem:[%s2 + $0x18] sm:$0xff] %vm2242, %v2213
  %2247 = vst.msk [vmem:[%s2 + $0x20] sm:$0xff] %vm2242, %v2214
  %2248 = vst.msk [vmem:[%s2 + $0x28] sm:$0xff] %vm2242, %v2215
  %2249 = vst.msk [vmem:[%s2 + $0x30] sm:$0xff] %vm2242, %v2216
  %2250 = vst.msk [vmem:[%s2 + $0x38] sm:$0xff] %vm2242, %v2217
  %2251 = vst.msk [vmem:[%s2 + $0x40] sm:$0xff] %vm2242, %v2218
  %2252 = vst.msk [vmem:[%s2 + $0x48] sm:$0xff] %vm2242, %v2219
  %2253 = vst.msk [vmem:[%s2 + $0x50] sm:$0xff] %vm2242, %v2220
  %2254 = vst.msk [vmem:[%s2 + $0x58] sm:$0xff] %vm2242, %v2221
  %2255 = vst.msk [vmem:[%s2 + $0x60] sm:$0xff] %vm2242, %v2222
  %2256 = vst.msk [vmem:[%s2 + $0x68] sm:$0xff] %vm2242, %v2223
  %2257 = vst.msk [vmem:[%s2 + $0x70] sm:$0xff] %vm2242, %v2224
  %2258 = vst.msk [vmem:[%s2 + $0x78] sm:$0xff] %vm2242, %v2225
  %2259 = vst.msk [vmem:[%s2 + $0x80] sm:$0xff] %vm2242, %v2226
  %2260 = vst.msk [vmem:[%s2 + $0x88] sm:$0xff] %vm2242, %v2227
  %2261 = vst.msk [vmem:[%s2 + $0x90] sm:$0xff] %vm2242, %v2228
  %2262 = vst.msk [vmem:[%s2 + $0x98] sm:$0xff] %vm2242, %v2229
  %2263 = vst.msk [vmem:[%s2 + $0xa0] sm:$0xff] %vm2242, %v2230
  %2264 = vst.msk [vmem:[%s2 + $0xa8] sm:$0xff] %vm2242, %v2231
  %2265 = vst.msk [vmem:[%s2 + $0xb0] sm:$0xff] %vm2242, %v2232
  %2266 = vst.msk [vmem:[%s2 + $0xb8] sm:$0xff] %vm2242, %v2233
  %2267 = vst.msk [vmem:[%s2 + $0xc0] sm:$0xff] %vm2242, %v2234
  %2268 = vst.msk [vmem:[%s2 + $0xc8] sm:$0xff] %vm2242, %v2235
  %2269 = vst.msk [vmem:[%s2 + $0xd0] sm:$0xff] %vm2242, %v2236
  %2270 = vst.msk [vmem:[%s2 + $0xd8] sm:$0xff] %vm2242, %v2237
  %2271 = vst.msk [vmem:[%s2 + $0xe0] sm:$0xff] %vm2242, %v2238
  %2272 = vst.msk [vmem:[%s2 + $0xe8] sm:$0xff] %vm2242, %v2239
  %2273 = vst.msk [vmem:[%s2 + $0xf0] sm:$0xff] %vm2242, %v2240
  %2274 = vst.msk [vmem:[%s2 + $0xf8] sm:$0xff] %vm2242, %v2241
  // Predicated region
  $region10: #{tpu_custom_call.1} parent=0 // pred_check
    _
  $region11: #{tpu_custom_call.1} parent=0 // pred_check_branch
    %2276 = sbr.rel (0) target = $region13
  $region12: #{tpu_custom_call.1} parent=0 // pred_region
    _
  $region13: #{tpu_custom_call.1} parent=0 // pred_fallthru
    _
  // Predicated region
  $region14: #{tpu_custom_call.1} parent=0 // pred_check
    _
  $region15: #{tpu_custom_call.1} parent=0 // pred_check_branch
    %2278 = sbr.rel (0) target = $region17
  $region16: #{tpu_custom_call.1} parent=0 // pred_region
    _
  $region17: #{tpu_custom_call.1} parent=0 // pred_fallthru
    _

</llo_original>
